<compile_context>
chip_gen: v7x
topology: tpu7x:2x2x1
jax: 0.10.0
libtpu: 0.0.40
codegen_flags: <defaults>
</compile_context>

<pallas_src>
import functools

import jax
import jax.numpy as jnp
from jax import lax
from jax.experimental import pallas as pl
from jax.experimental.pallas import tpu as pltpu
from jax.scipy.special import erf as _erf_exact

D_MODEL = 32
EXPANSION = 4
NUM_HEADS = 8
SEQ_LEN = 8
BATCH = 2

_NEG_INF = -1e9

# Row indices inside the 'vec' segment of the parameter slab.
(_V_CONV_B, _V_PLN_G, _V_PLN_B, _V_QKVG_B,
 _V_PROJ_B, _V_NORM_G, _V_NORM_B, _V_OUT_B) = range(8)


def _slab_layout(d_model, expansion, num_heads, batch, seq_len):
    """Row offsets of every parameter segment inside the (rows, 128) slab.
    Used by both pack_params (host) and the kernel (trace time)."""
    D, E, H = d_model, expansion, num_heads
    DE = D * E
    BT = batch * seq_len
    HBT = H * BT
    off, r = {}, 0

    def seg(name, rows):
        nonlocal r
        off[name] = r
        r += rows
        r = -(-r // 8) * 8            # keep every segment start 8-row aligned

    seg('vec', 8)
    seg('wtap0', D)
    seg('wtap1', D)
    seg('wtap2', D)
    seg('wqkvg', D)
    seg('wp', DE)
    seg('wo', D)
    seg('attn_bias', HBT)
    seg('head_mask', HBT)
    seg('mask_prev', BT)
    seg('mask_next', BT)
    off['_rows'] = r
    return off


def _layer_norm(h, gamma, beta, eps=1e-5):
    mu = jnp.mean(h, axis=-1, keepdims=True)
    c = h - mu
    var = jnp.mean(c * c, axis=-1, keepdims=True)
    return c * lax.rsqrt(var + eps) * gamma + beta


def _erf(x):
    # Abramowitz & Stegun 7.1.26, |err| <= 1.5e-7 (below f32 resolution for
    # GELU); only mul/add/exp/where so it lowers on the VPU/EUP.
    a1, a2, a3, a4, a5 = (0.254829592, -0.284496736, 1.421413741,
                          -1.453152027, 1.061405429)
    p = 0.3275911
    ax = jnp.abs(x)
    t = 1.0 / (1.0 + p * ax)
    poly = ((((a5 * t + a4) * t + a3) * t + a2) * t + a1) * t
    y = 1.0 - poly * jnp.exp(-ax * ax)
    return jnp.where(x < 0, -y, y)


def _gelu_exact(x):
    return 0.5 * x * (1.0 + _erf(x * 0.7071067811865476))


def _msb_kernel(x_ref, slab_ref, out_ref, *, d_model, expansion, num_heads,
                batch, seq_len):
    f32 = jnp.float32
    D, E, H = d_model, expansion, num_heads
    DE = D * E
    B, T = batch, seq_len
    BT = B * T
    HBT = H * BT
    L = _slab_layout(D, E, H, B, T)

    def mat(name, rows, cols):              # static slab view -> load
        a = L[name]
        return slab_ref[a:a + rows, 0:cols]

    def vrow(i, cols):                       # (1, cols) bias/scale row
        a = L['vec'] + i
        return slab_ref[a:a + 1, 0:cols]

    x = x_ref[...]                           # (BT, D) folded batch*time, f32

    # ---------- depthwise Conv1d(D, D*E, k=3, pad=1, groups=D) ---------------
    # out[t] = w0*x[t-1] + w1*x[t] + w2*x[t+1]; the rep-mask is pre-folded
    # into the three (D, DE) tap matrices, so the three matmuls are mutually
    # independent.  Time shifts via sublane pltpu.roll (positive shifts only,
    # XLU) + precomputed boundary-row masks that also zero the seq-edge pads.
    x_prev = pltpu.roll(x, shift=1, axis=0) * mat('mask_prev', BT, D)
    x_next = pltpu.roll(x, shift=BT - 1, axis=0) * mat('mask_next', BT, D)
    h = (jnp.dot(x_prev, mat('wtap0', D, DE), preferred_element_type=f32)
         + jnp.dot(x, mat('wtap1', D, DE), preferred_element_type=f32)
         + jnp.dot(x_next, mat('wtap2', D, DE), preferred_element_type=f32)
         + vrow(_V_CONV_B, DE))                                    # (BT, DE)

    # ---------- projection: LayerNorm(DE) -> GELU -> Linear(DE, D) -----------
    h = _layer_norm(h, vrow(_V_PLN_G, DE), vrow(_V_PLN_B, DE))
    h = _gelu_exact(h)
    x_conv = (jnp.dot(h, mat('wp', DE, D), preferred_element_type=f32)
              + vrow(_V_PROJ_B, D))                                # (BT, D)

    # ---------- GeometricAttention on LayerNorm(x) ----------------------------
    # 1/sqrt(head_dim) is already folded into the q columns of wqkvg / qkvg_b.
    xn = _layer_norm(x, vrow(_V_NORM_G, D), vrow(_V_NORM_B, D))
    qkvg = (jnp.dot(xn, mat('wqkvg', D, 4 * D), preferred_element_type=f32)
            + vrow(_V_QKVG_B, 4 * D))                              # (BT, 4D)
    k = qkvg[:, D:2 * D]
    v = qkvg[:, 2 * D:3 * D]

    # One lane-dense broadcast of qkvg serves both the packed q and the
    # sublane-replicated gate (heads packed along sublanes).
    qkvg_blk = jnp.broadcast_to(qkvg[None], (H, BT, 4 * D)).reshape(HBT, 4 * D)
    head_mask = mat('head_mask', HBT, D)                           # 0/1, (H*BT, D)
    q_blk = qkvg_blk[:, 0:D] * head_mask
    gate_mask = jax.nn.sigmoid(qkvg_blk[:, 3 * D:4 * D]) * head_mask

    s = lax.dot_general(q_blk, k, (((1,), (1,)), ((), ())),
                        preferred_element_type=f32)                # (H*BT, BT)
    s = s + mat('attn_bias', HBT, BT)        # rel-pos bias + cross-batch -1e9
    s = s - jnp.max(s, axis=-1, keepdims=True)
    p = jnp.exp(s)
    p = p * pl.reciprocal(jnp.sum(p, axis=-1, keepdims=True), approx=True)

    o_pack = jnp.dot(p, v, preferred_element_type=f32)             # (H*BT, D)
    o_pack = o_pack * gate_mask
    # Collapse-free epilogue: out-proj on the packed array, then sum the H
    # sublane blocks on the VPU (matmul is linear in the rows).
    x_attn_pack = jnp.dot(o_pack, mat('wo', D, D),
                          preferred_element_type=f32)              # (H*BT, D)
    x_attn = jnp.sum(x_attn_pack.reshape(H, BT, D), axis=0) + vrow(_V_OUT_B, D)

    # edge_update bias is constant along the softmax axis (cancels exactly);
    # dropout is the identity in eval mode.
    out_ref[...] = (x_conv + x_attn + x).astype(out_ref.dtype)


def init_params(key, d_model=D_MODEL, expansion=EXPANSION, num_heads=NUM_HEADS):
    """Parameters matching the PyTorch module (edge_update params included;
    they are used by the pure-JAX reference but not needed by the kernel)."""
    D, E, H = d_model, expansion, num_heads
    DE = D * E
    keys = jax.random.split(key, 19)
    nrm = lambda k, shape, s: (s * jax.random.normal(k, shape)).astype(jnp.float32)
    p = {}
    p['conv_w'] = nrm(keys[0], (DE, 1, 3), 3 ** -0.5)   # Conv1d (out, in/groups, k)
    p['conv_b'] = nrm(keys[1], (DE,), 0.1)
    p['proj_ln_g'] = 1.0 + nrm(keys[2], (DE,), 0.1)
    p['proj_ln_b'] = nrm(keys[3], (DE,), 0.1)
    p['proj_w'] = nrm(keys[4], (D, DE), DE ** -0.5)     # Linear(4D -> D), (out, in)
    p['proj_b'] = nrm(keys[5], (D,), 0.1)
    p['norm_g'] = 1.0 + nrm(keys[6], (D,), 0.1)
    p['norm_b'] = nrm(keys[7], (D,), 0.1)
    p['qkv_w'] = nrm(keys[8], (3 * D, D), D ** -0.5)
    p['qkv_b'] = nrm(keys[9], (3 * D,), 0.1)
    p['gate_w'] = nrm(keys[10], (D, D), D ** -0.5)
    p['gate_b'] = nrm(keys[11], (D,), 0.1)
    p['edge1_w'] = nrm(keys[12], (4 * D, D), D ** -0.5)
    p['edge1_b'] = nrm(keys[13], (4 * D,), 0.1)
    p['edge2_w'] = nrm(keys[14], (H, 4 * D), (4 * D) ** -0.5)
    p['edge2_b'] = nrm(keys[15], (H,), 0.1)
    p['out_w'] = nrm(keys[16], (D, D), D ** -0.5)
    p['out_b'] = nrm(keys[17], (D,), 0.1)
    p['relpos'] = nrm(keys[18], (512, H), 0.1)          # nn.Embedding(512, H)
    return p


def pack_params(p, batch, seq_len):
    """One-time repack (outside the hot path) into a single (rows, 128) slab."""
    f32 = jnp.float32
    DE = p['conv_w'].shape[0]
    D = p['proj_w'].shape[0]
    E = DE // D
    H = p['relpos'].shape[1]
    hd = D // H
    B, T = batch, seq_len
    BT = B * T
    HBT = H * BT
    W = 128
    L = _slab_layout(D, E, H, B, T)
    slab = jnp.zeros((L['_rows'], W), f32)

    def put(name, m):
        nonlocal slab
        m = jnp.asarray(m, f32)
        a = L[name]
        slab = slab.at[a:a + m.shape[0], 0:m.shape[1]].set(m)

    inv_scale = 1.0 / float(hd) ** 0.5

    # ---- vec block: one 128-lane row per bias / LN scale -------------------
    def rowvec(v):
        v = jnp.asarray(v, f32)
        return jnp.pad(v, (0, W - v.shape[0]))

    qkvg_b = jnp.concatenate([p['qkv_b'][:D] * inv_scale,   # q bias pre-scaled
                              p['qkv_b'][D:], p['gate_b']])
    put('vec', jnp.stack([
        rowvec(p['conv_b']), rowvec(p['proj_ln_g']), rowvec(p['proj_ln_b']),
        rowvec(qkvg_b), rowvec(p['proj_b']), rowvec(p['norm_g']),
        rowvec(p['norm_b']), rowvec(p['out_b'])], axis=0))

    # ---- depthwise conv taps folded with the group/rep mask ----------------
    rep = (jnp.arange(DE)[None, :] // E == jnp.arange(D)[:, None]).astype(f32)
    put('wtap0', rep * p['conv_w'][:, 0, 0].astype(f32)[None, :])
    put('wtap1', rep * p['conv_w'][:, 0, 1].astype(f32)[None, :])
    put('wtap2', rep * p['conv_w'][:, 0, 2].astype(f32)[None, :])

    # ---- fused qkv + gating weights, q columns pre-scaled ------------------
    wqkvg = jnp.concatenate([p['qkv_w'].T.astype(f32),
                             p['gate_w'].T.astype(f32)], axis=1)      # (D, 4D)
    col_scale = jnp.concatenate([jnp.full((D,), inv_scale, f32),
                                 jnp.ones((3 * D,), f32)])
    put('wqkvg', wqkvg * col_scale[None, :])

    put('wp', p['proj_w'].T)                                           # (DE, D)
    put('wo', p['out_w'].T)                                            # (D, D)

    # ---- rel-pos bias + cross-batch -1e9 mask, packed to (H*BT, BT) --------
    idx = jnp.clip(jnp.arange(T)[:, None] - jnp.arange(T)[None, :], -255, 255) + 255
    rel = jnp.transpose(p['relpos'][idx].astype(f32), (2, 0, 1))       # (H, T, T)
    rel5 = jnp.broadcast_to(rel[:, None, :, None, :], (H, B, T, B, T))
    same_b = (jnp.arange(B)[:, None, None, None] == jnp.arange(B)[None, None, :, None])
    put('attn_bias', jnp.where(same_b[None], rel5, _NEG_INF).reshape(HBT, BT))

    # ---- head mask for sublane-packed heads --------------------------------
    head_mask = (jnp.arange(HBT)[:, None] // BT
                 == jnp.arange(D)[None, :] // hd).astype(f32)          # (H*BT, D)
    put('head_mask', head_mask)

    # ---- conv boundary-row masks (zero the seq-edge pads after roll) -------
    t = jnp.arange(BT) % T
    put('mask_prev', jnp.broadcast_to((t != 0).astype(f32)[:, None], (BT, W)))
    put('mask_next', jnp.broadcast_to((t != T - 1).astype(f32)[:, None], (BT, W)))

    return {'slab': slab}


@jax.jit
def multi_scale_temporal_block(x, packed):
    B, T, D = x.shape
    BT = B * T
    slab = packed['slab']
    kernel = functools.partial(_msb_kernel, d_model=D, expansion=EXPANSION,
                               num_heads=NUM_HEADS, batch=B, seq_len=T)
    out = pl.pallas_call(
        kernel,
        out_shape=jax.ShapeDtypeStruct((BT, D), x.dtype),
        grid=(1,),
        in_specs=[
            pl.BlockSpec((BT, D), lambda i: (0, 0)),
            pl.BlockSpec(slab.shape, lambda i: (0, 0)),
        ],
        out_specs=pl.BlockSpec((BT, D), lambda i: (0, 0)),
        compiler_params=pltpu.CompilerParams(dimension_semantics=("arbitrary",)),
    )(x.reshape(BT, D), slab)
    return out.reshape(B, T, D)


def _reference_forward(x, p):
    """Pure-JAX replica of MultiScaleTemporalBlock.forward (eval mode),
    including the (softmax-invariant) edge_update branch."""
    hi = lax.Precision.HIGHEST
    B, T, D = x.shape
    H = p['relpos'].shape[1]
    hd = D // H
    # dynamic_conv: depthwise Conv1d(D, 4D, k=3, pad=1, groups=D)
    xc = lax.conv_general_dilated(
        x.transpose(0, 2, 1), p['conv_w'], window_strides=(1,), padding=((1, 1),),
        feature_group_count=D, dimension_numbers=('NCH', 'OIH', 'NCH'),
        precision=hi) + p['conv_b'][None, :, None]
    xc = xc.transpose(0, 2, 1)
    # projection: LayerNorm -> GELU(exact) -> Linear
    mu = xc.mean(-1, keepdims=True)
    var = ((xc - mu) ** 2).mean(-1, keepdims=True)
    h = (xc - mu) * lax.rsqrt(var + 1e-5) * p['proj_ln_g'] + p['proj_ln_b']
    h = 0.5 * h * (1.0 + _erf_exact(h * 0.7071067811865476))
    x_conv = jnp.matmul(h, p['proj_w'].T, precision=hi) + p['proj_b']
    # GeometricAttention on LayerNorm(x)
    mu = x.mean(-1, keepdims=True)
    var = ((x - mu) ** 2).mean(-1, keepdims=True)
    xn = (x - mu) * lax.rsqrt(var + 1e-5) * p['norm_g'] + p['norm_b']
    qkv = jnp.matmul(xn, p['qkv_w'].T, precision=hi) + p['qkv_b']
    q, k, v = jnp.split(qkv, 3, axis=-1)
    to_heads = lambda y: y.reshape(B, T, H, hd).transpose(0, 2, 1, 3)
    q, k, v = to_heads(q), to_heads(k), to_heads(v)
    gate = to_heads(jax.nn.sigmoid(jnp.matmul(xn, p['gate_w'].T, precision=hi)
                                   + p['gate_b']))
    idx = jnp.clip(jnp.arange(T)[:, None] - jnp.arange(T)[None, :], -255, 255) + 255
    rel = jnp.transpose(p['relpos'][idx], (2, 0, 1))[None]          # (1, H, T, T)
    e = jnp.matmul(xn, p['edge1_w'].T, precision=hi) + p['edge1_b']
    e = e * jax.nn.sigmoid(e)
    e = jnp.matmul(e, p['edge2_w'].T, precision=hi) + p['edge2_b']  # (B, T, H)
    e = e.transpose(0, 2, 1)[..., None]                             # (B, H, T, 1)
    attn = jnp.einsum('bhqd,bhkd->bhqk', q, k, precision=hi) / float(hd) ** 0.5
    attn = jax.nn.softmax(attn + rel + e, axis=-1)
    o = jnp.einsum('bhqk,bhkd->bhqd', attn, v, precision=hi) * gate
    o = o.transpose(0, 2, 1, 3).reshape(B, T, D)
    x_attn = jnp.matmul(o, p['out_w'].T, precision=hi) + p['out_b']
    return x_conv + x_attn + x


if __name__ == "__main__":
    key = jax.random.PRNGKey(0)
    kx, kp = jax.random.split(key)
    x = jax.random.normal(kx, (BATCH, SEQ_LEN, D_MODEL), dtype=jnp.float32)
    params = init_params(kp)
    packed = pack_params(params, BATCH, SEQ_LEN)   # one-time prep, outside hot path

    out = multi_scale_temporal_block(x, packed)
    jax.block_until_ready(out)
    assert out.shape == (BATCH, SEQ_LEN, D_MODEL)
    assert bool(jnp.all(jnp.isfinite(out)))

    ref = _reference_forward(x, params)
    max_err = float(jnp.max(jnp.abs(out - ref)))
    assert max_err < 5e-3, f"kernel/reference mismatch: max abs err = {max_err}"
    print("KERNEL_OK")
</pallas_src>

<mosaic_0001>
module attributes {stable_mosaic.version = 11 : i64} {
  func.func @_msb_kernel(%arg0: i32, %arg1: memref<16x32xf32, #tpu.memory_space<vmem>>, %arg2: memref<584x128xf32, #tpu.memory_space<vmem>>, %arg3: memref<16x32xf32, #tpu.memory_space<vmem>>) attributes {dimension_semantics = [#tpu.dimension_semantics<arbitrary>], iteration_bounds = array<i64: 1>, scalar_prefetch = 0 : i64, scratch_operands = 0 : i64, tpu.core_type = #tpu.core_type<tc>, window_params = [{pipeline_mode = #tpu.pipeline_mode<synchronous>, transform_indices = @transform_0, window_bounds = array<i64: 16, 32>}, {pipeline_mode = #tpu.pipeline_mode<synchronous>, transform_indices = @transform_1, window_bounds = array<i64: 584, 128>}, {pipeline_mode = #tpu.pipeline_mode<synchronous>, transform_indices = @transform_2, window_bounds = array<i64: 16, 32>}]} {
    %c0 = arith.constant 0 : index
    %c0_0 = arith.constant 0 : index
    %0 = vector.load %arg1[%c0, %c0_0] : memref<16x32xf32, #tpu.memory_space<vmem>>, vector<16x32xf32>
    %c1_i32 = arith.constant 1 : i32
    %1 = tpu.dynamic_rotate %0 by %c1_i32 dim 0 : vector<16x32xf32>, i32 -> vector<16x32xf32>
    %c552 = arith.constant 552 : index
    %c0_1 = arith.constant 0 : index
    %2 = vector.load %arg2[%c552, %c0_1] : memref<584x128xf32, #tpu.memory_space<vmem>>, vector<16x32xf32>
    %3 = arith.mulf %1, %2 : vector<16x32xf32>
    %c15_i32 = arith.constant 15 : i32
    %4 = tpu.dynamic_rotate %0 by %c15_i32 dim 0 : vector<16x32xf32>, i32 -> vector<16x32xf32>
    %c568 = arith.constant 568 : index
    %c0_2 = arith.constant 0 : index
    %5 = vector.load %arg2[%c568, %c0_2] : memref<584x128xf32, #tpu.memory_space<vmem>>, vector<16x32xf32>
    %6 = arith.mulf %4, %5 : vector<16x32xf32>
    %c8 = arith.constant 8 : index
    %c0_3 = arith.constant 0 : index
    %7 = vector.load %arg2[%c8, %c0_3] : memref<584x128xf32, #tpu.memory_space<vmem>>, vector<32x128xf32>
    %cst = arith.constant dense<0.000000e+00> : vector<16x128xf32>
    %8 = tpu.matmul %3, %7, %cst {dimension_numbers = #tpu.dot_dimension_numbers<[1], [0], [0], [1], [0, 0, 1, 1], [], []>} : vector<16x32xf32>, vector<32x128xf32>, vector<16x128xf32> -> vector<16x128xf32>
    %c40 = arith.constant 40 : index
    %c0_4 = arith.constant 0 : index
    %9 = vector.load %arg2[%c40, %c0_4] : memref<584x128xf32, #tpu.memory_space<vmem>>, vector<32x128xf32>
    %cst_5 = arith.constant dense<0.000000e+00> : vector<16x128xf32>
    %10 = tpu.matmul %0, %9, %cst_5 {dimension_numbers = #tpu.dot_dimension_numbers<[1], [0], [0], [1], [0, 0, 1, 1], [], []>} : vector<16x32xf32>, vector<32x128xf32>, vector<16x128xf32> -> vector<16x128xf32>
    %11 = arith.addf %8, %10 : vector<16x128xf32>
    %c72 = arith.constant 72 : index
    %c0_6 = arith.constant 0 : index
    %12 = vector.load %arg2[%c72, %c0_6] : memref<584x128xf32, #tpu.memory_space<vmem>>, vector<32x128xf32>
    %cst_7 = arith.constant dense<0.000000e+00> : vector<16x128xf32>
    %13 = tpu.matmul %6, %12, %cst_7 {dimension_numbers = #tpu.dot_dimension_numbers<[1], [0], [0], [1], [0, 0, 1, 1], [], []>} : vector<16x32xf32>, vector<32x128xf32>, vector<16x128xf32> -> vector<16x128xf32>
    %14 = arith.addf %11, %13 : vector<16x128xf32>
    %c0_8 = arith.constant 0 : index
    %c0_9 = arith.constant 0 : index
    %15 = vector.load %arg2[%c0_8, %c0_9] : memref<584x128xf32, #tpu.memory_space<vmem>>, vector<1x128xf32>
    %16 = vector.broadcast %15 : vector<1x128xf32> to vector<16x128xf32>
    %17 = arith.addf %14, %16 : vector<16x128xf32>
    %c1 = arith.constant 1 : index
    %c0_10 = arith.constant 0 : index
    %18 = vector.load %arg2[%c1, %c0_10] : memref<584x128xf32, #tpu.memory_space<vmem>>, vector<1x128xf32>
    %c2 = arith.constant 2 : index
    %c0_11 = arith.constant 0 : index
    %19 = vector.load %arg2[%c2, %c0_11] : memref<584x128xf32, #tpu.memory_space<vmem>>, vector<1x128xf32>
    %cst_12 = arith.constant dense<0.000000e+00> : vector<16xf32>
    %20 = vector.multi_reduction <add>, %17, %cst_12 [1] : vector<16x128xf32> to vector<16xf32>
    %21 = vector.shape_cast %20 : vector<16xf32> to vector<16x1xf32>
    %cst_13 = arith.constant 1.280000e+02 : f32
    %22 = vector.broadcast %cst_13 : f32 to vector<16x1xf32>
    %23 = arith.divf %21, %22 : vector<16x1xf32>
    %24 = vector.broadcast %23 : vector<16x1xf32> to vector<16x128xf32>
    %25 = arith.subf %17, %24 : vector<16x128xf32>
    %26 = arith.mulf %25, %25 : vector<16x128xf32>
    %cst_14 = arith.constant dense<0.000000e+00> : vector<16xf32>
    %27 = vector.multi_reduction <add>, %26, %cst_14 [1] : vector<16x128xf32> to vector<16xf32>
    %28 = vector.shape_cast %27 : vector<16xf32> to vector<16x1xf32>
    %cst_15 = arith.constant 1.280000e+02 : f32
    %29 = vector.broadcast %cst_15 : f32 to vector<16x1xf32>
    %30 = arith.divf %28, %29 : vector<16x1xf32>
    %cst_16 = arith.constant 9.99999974E-6 : f32
    %31 = vector.broadcast %cst_16 : f32 to vector<16x1xf32>
    %32 = arith.addf %30, %31 : vector<16x1xf32>
    %33 = math.rsqrt %32 : vector<16x1xf32>
    %34 = vector.broadcast %33 : vector<16x1xf32> to vector<16x128xf32>
    %35 = arith.mulf %25, %34 : vector<16x128xf32>
    %36 = vector.broadcast %18 : vector<1x128xf32> to vector<16x128xf32>
    %37 = arith.mulf %35, %36 : vector<16x128xf32>
    %38 = vector.broadcast %19 : vector<1x128xf32> to vector<16x128xf32>
    %39 = arith.addf %37, %38 : vector<16x128xf32>
    %cst_17 = arith.constant 5.000000e-01 : f32
    %40 = vector.broadcast %cst_17 : f32 to vector<16x128xf32>
    %41 = arith.mulf %40, %39 : vector<16x128xf32>
    %cst_18 = arith.constant 0.707106769 : f32
    %42 = vector.broadcast %cst_18 : f32 to vector<16x128xf32>
    %43 = arith.mulf %39, %42 : vector<16x128xf32>
    %44 = math.absf %43 : vector<16x128xf32>
    %cst_19 = arith.constant 0.327591091 : f32
    %45 = vector.broadcast %cst_19 : f32 to vector<16x128xf32>
    %46 = arith.mulf %45, %44 : vector<16x128xf32>
    %cst_20 = arith.constant 1.000000e+00 : f32
    %47 = vector.broadcast %cst_20 : f32 to vector<16x128xf32>
    %48 = arith.addf %47, %46 : vector<16x128xf32>
    %cst_21 = arith.constant 1.000000e+00 : f32
    %49 = vector.broadcast %cst_21 : f32 to vector<16x128xf32>
    %50 = arith.divf %49, %48 : vector<16x128xf32>
    %cst_22 = arith.constant 1.06140542 : f32
    %51 = vector.broadcast %cst_22 : f32 to vector<16x128xf32>
    %52 = arith.mulf %51, %50 : vector<16x128xf32>
    %cst_23 = arith.constant -1.45315206 : f32
    %53 = vector.broadcast %cst_23 : f32 to vector<16x128xf32>
    %54 = arith.addf %52, %53 : vector<16x128xf32>
    %55 = arith.mulf %54, %50 : vector<16x128xf32>
    %cst_24 = arith.constant 1.42141378 : f32
    %56 = vector.broadcast %cst_24 : f32 to vector<16x128xf32>
    %57 = arith.addf %55, %56 : vector<16x128xf32>
    %58 = arith.mulf %57, %50 : vector<16x128xf32>
    %cst_25 = arith.constant -0.284496725 : f32
    %59 = vector.broadcast %cst_25 : f32 to vector<16x128xf32>
    %60 = arith.addf %58, %59 : vector<16x128xf32>
    %61 = arith.mulf %60, %50 : vector<16x128xf32>
    %cst_26 = arith.constant 0.254829586 : f32
    %62 = vector.broadcast %cst_26 : f32 to vector<16x128xf32>
    %63 = arith.addf %61, %62 : vector<16x128xf32>
    %64 = arith.mulf %63, %50 : vector<16x128xf32>
    %cst_27 = arith.constant 0.000000e+00 : f32
    %65 = vector.broadcast %cst_27 : f32 to vector<16x128xf32>
    %66 = arith.subf %65, %44 : vector<16x128xf32>
    %67 = arith.mulf %66, %44 : vector<16x128xf32>
    %68 = math.exp %67 : vector<16x128xf32>
    %69 = arith.mulf %64, %68 : vector<16x128xf32>
    %cst_28 = arith.constant 1.000000e+00 : f32
    %70 = vector.broadcast %cst_28 : f32 to vector<16x128xf32>
    %71 = arith.subf %70, %69 : vector<16x128xf32>
    %cst_29 = arith.constant 0.000000e+00 : f32
    %72 = vector.broadcast %cst_29 : f32 to vector<16x128xf32>
    %73 = arith.cmpf olt, %43, %72 : vector<16x128xf32>
    %cst_30 = arith.constant 0.000000e+00 : f32
    %74 = vector.broadcast %cst_30 : f32 to vector<16x128xf32>
    %75 = arith.subf %74, %71 : vector<16x128xf32>
    %76 = arith.select %73, %75, %71 : vector<16x128xi1>, vector<16x128xf32>
    %cst_31 = arith.constant 1.000000e+00 : f32
    %77 = vector.broadcast %cst_31 : f32 to vector<16x128xf32>
    %78 = arith.addf %77, %76 : vector<16x128xf32>
    %79 = arith.mulf %41, %78 : vector<16x128xf32>
    %c136 = arith.constant 136 : index
    %c0_32 = arith.constant 0 : index
    %80 = vector.load %arg2[%c136, %c0_32] : memref<584x128xf32, #tpu.memory_space<vmem>>, vector<128x32xf32>
    %cst_33 = arith.constant dense<0.000000e+00> : vector<16x32xf32>
    %81 = tpu.matmul %79, %80, %cst_33 {dimension_numbers = #tpu.dot_dimension_numbers<[1], [0], [0], [1], [0, 0, 1, 1], [], []>} : vector<16x128xf32>, vector<128x32xf32>, vector<16x32xf32> -> vector<16x32xf32>
    %c4 = arith.constant 4 : index
    %c0_34 = arith.constant 0 : index
    %82 = vector.load %arg2[%c4, %c0_34] : memref<584x128xf32, #tpu.memory_space<vmem>>, vector<1x32xf32>
    %83 = vector.broadcast %82 : vector<1x32xf32> to vector<16x32xf32>
    %84 = arith.addf %81, %83 : vector<16x32xf32>
    %c5 = arith.constant 5 : index
    %c0_35 = arith.constant 0 : index
    %85 = vector.load %arg2[%c5, %c0_35] : memref<584x128xf32, #tpu.memory_space<vmem>>, vector<1x32xf32>
    %c6 = arith.constant 6 : index
    %c0_36 = arith.constant 0 : index
    %86 = vector.load %arg2[%c6, %c0_36] : memref<584x128xf32, #tpu.memory_space<vmem>>, vector<1x32xf32>
    %cst_37 = arith.constant dense<0.000000e+00> : vector<16xf32>
    %87 = vector.multi_reduction <add>, %0, %cst_37 [1] : vector<16x32xf32> to vector<16xf32>
    %88 = vector.shape_cast %87 : vector<16xf32> to vector<16x1xf32>
    %cst_38 = arith.constant 3.200000e+01 : f32
    %89 = vector.broadcast %cst_38 : f32 to vector<16x1xf32>
    %90 = arith.divf %88, %89 : vector<16x1xf32>
    %91 = vector.broadcast %90 : vector<16x1xf32> to vector<16x32xf32>
    %92 = arith.subf %0, %91 : vector<16x32xf32>
    %93 = arith.mulf %92, %92 : vector<16x32xf32>
    %cst_39 = arith.constant dense<0.000000e+00> : vector<16xf32>
    %94 = vector.multi_reduction <add>, %93, %cst_39 [1] : vector<16x32xf32> to vector<16xf32>
    %95 = vector.shape_cast %94 : vector<16xf32> to vector<16x1xf32>
    %cst_40 = arith.constant 3.200000e+01 : f32
    %96 = vector.broadcast %cst_40 : f32 to vector<16x1xf32>
    %97 = arith.divf %95, %96 : vector<16x1xf32>
    %cst_41 = arith.constant 9.99999974E-6 : f32
    %98 = vector.broadcast %cst_41 : f32 to vector<16x1xf32>
    %99 = arith.addf %97, %98 : vector<16x1xf32>
    %100 = math.rsqrt %99 : vector<16x1xf32>
    %101 = vector.broadcast %100 : vector<16x1xf32> to vector<16x32xf32>
    %102 = arith.mulf %92, %101 : vector<16x32xf32>
    %103 = vector.broadcast %85 : vector<1x32xf32> to vector<16x32xf32>
    %104 = arith.mulf %102, %103 : vector<16x32xf32>
    %105 = vector.broadcast %86 : vector<1x32xf32> to vector<16x32xf32>
    %106 = arith.addf %104, %105 : vector<16x32xf32>
    %c104 = arith.constant 104 : index
    %c0_42 = arith.constant 0 : index
    %107 = vector.load %arg2[%c104, %c0_42] : memref<584x128xf32, #tpu.memory_space<vmem>>, vector<32x128xf32>
    %cst_43 = arith.constant dense<0.000000e+00> : vector<16x128xf32>
    %108 = tpu.matmul %106, %107, %cst_43 {dimension_numbers = #tpu.dot_dimension_numbers<[1], [0], [0], [1], [0, 0, 1, 1], [], []>} : vector<16x32xf32>, vector<32x128xf32>, vector<16x128xf32> -> vector<16x128xf32>
    %c3 = arith.constant 3 : index
    %c0_44 = arith.constant 0 : index
    %109 = vector.load %arg2[%c3, %c0_44] : memref<584x128xf32, #tpu.memory_space<vmem>>, vector<1x128xf32>
    %110 = vector.broadcast %109 : vector<1x128xf32> to vector<16x128xf32>
    %111 = arith.addf %108, %110 : vector<16x128xf32>
    %112 = vector.extract_strided_slice %111 {offsets = [0, 32], sizes = [16, 32], strides = [1, 1]} : vector<16x128xf32> to vector<16x32xf32>
    %113 = vector.extract_strided_slice %111 {offsets = [0, 64], sizes = [16, 32], strides = [1, 1]} : vector<16x128xf32> to vector<16x32xf32>
    %114 = vector.shape_cast %111 : vector<16x128xf32> to vector<1x16x128xf32>
    %115 = vector.shape_cast %114 : vector<1x16x128xf32> to vector<1x16x128xf32>
    %116 = vector.broadcast %115 : vector<1x16x128xf32> to vector<8x16x128xf32>
    %117 = vector.shape_cast %116 : vector<8x16x128xf32> to vector<128x128xf32>
    %c424 = arith.constant 424 : index
    %c0_45 = arith.constant 0 : index
    %118 = vector.load %arg2[%c424, %c0_45] : memref<584x128xf32, #tpu.memory_space<vmem>>, vector<128x32xf32>
    %119 = vector.extract_strided_slice %117 {offsets = [0, 0], sizes = [128, 32], strides = [1, 1]} : vector<128x128xf32> to vector<128x32xf32>
    %120 = arith.mulf %119, %118 : vector<128x32xf32>
    %121 = vector.extract_strided_slice %117 {offsets = [0, 96], sizes = [128, 32], strides = [1, 1]} : vector<128x128xf32> to vector<128x32xf32>
    %122 = arith.negf %121 : vector<128x32xf32>
    %123 = math.exp %122 : vector<128x32xf32>
    %cst_46 = arith.constant 1.000000e+00 : f32
    %124 = vector.broadcast %cst_46 : f32 to vector<128x32xf32>
    %125 = arith.addf %124, %123 : vector<128x32xf32>
    %126 = arith.divf %124, %125 : vector<128x32xf32>
    %127 = arith.mulf %126, %118 : vector<128x32xf32>
    %cst_47 = arith.constant dense<0.000000e+00> : vector<128x16xf32>
    %128 = tpu.matmul %120, %112, %cst_47 {dimension_numbers = #tpu.dot_dimension_numbers<[1], [1], [0], [0], [0, 0, 1, 0], [], []>} : vector<128x32xf32>, vector<16x32xf32>, vector<128x16xf32> -> vector<128x16xf32>
    %c296 = arith.constant 296 : index
    %c0_48 = arith.constant 0 : index
    %129 = vector.load %arg2[%c296, %c0_48] : memref<584x128xf32, #tpu.memory_space<vmem>>, vector<128x16xf32>
    %130 = arith.addf %128, %129 : vector<128x16xf32>
    %cst_49 = arith.constant dense<0xFF800000> : vector<128xf32>
    %131 = vector.multi_reduction <maximumf>, %130, %cst_49 [1] : vector<128x16xf32> to vector<128xf32>
    %132 = vector.shape_cast %131 : vector<128xf32> to vector<128x1xf32>
    %133 = vector.broadcast %132 : vector<128x1xf32> to vector<128x16xf32>
    %134 = arith.subf %130, %133 : vector<128x16xf32>
    %135 = math.exp %134 : vector<128x16xf32>
    %cst_50 = arith.constant dense<0.000000e+00> : vector<128xf32>
    %136 = vector.multi_reduction <add>, %135, %cst_50 [1] : vector<128x16xf32> to vector<128xf32>
    %137 = vector.shape_cast %136 : vector<128xf32> to vector<128x1xf32>
    %138 = tpu.reciprocal %137 {approx = true} : vector<128x1xf32> -> vector<128x1xf32>
    %139 = vector.broadcast %138 : vector<128x1xf32> to vector<128x16xf32>
    %140 = arith.mulf %135, %139 : vector<128x16xf32>
    %cst_51 = arith.constant dense<0.000000e+00> : vector<128x32xf32>
    %141 = tpu.matmul %140, %113, %cst_51 {dimension_numbers = #tpu.dot_dimension_numbers<[1], [0], [0], [1], [0, 0, 1, 1], [], []>} : vector<128x16xf32>, vector<16x32xf32>, vector<128x32xf32> -> vector<128x32xf32>
    %142 = arith.mulf %141, %127 : vector<128x32xf32>
    %c264 = arith.constant 264 : index
    %c0_52 = arith.constant 0 : index
    %143 = vector.load %arg2[%c264, %c0_52] : memref<584x128xf32, #tpu.memory_space<vmem>>, vector<32x32xf32>
    %cst_53 = arith.constant dense<0.000000e+00> : vector<128x32xf32>
    %144 = tpu.matmul %142, %143, %cst_53 {dimension_numbers = #tpu.dot_dimension_numbers<[1], [0], [0], [1], [0, 0, 1, 1], [], []>} : vector<128x32xf32>, vector<32x32xf32>, vector<128x32xf32> -> vector<128x32xf32>
    %145 = vector.shape_cast %144 : vector<128x32xf32> to vector<8x16x32xf32>
    %cst_54 = arith.constant dense<0.000000e+00> : vector<16x32xf32>
    %146 = vector.multi_reduction <add>, %145, %cst_54 [0] : vector<8x16x32xf32> to vector<16x32xf32>
    %c7 = arith.constant 7 : index
    %c0_55 = arith.constant 0 : index
    %147 = vector.load %arg2[%c7, %c0_55] : memref<584x128xf32, #tpu.memory_space<vmem>>, vector<1x32xf32>
    %148 = vector.broadcast %147 : vector<1x32xf32> to vector<16x32xf32>
    %149 = arith.addf %146, %148 : vector<16x32xf32>
    %150 = arith.addf %84, %149 : vector<16x32xf32>
    %151 = arith.addf %150, %0 : vector<16x32xf32>
    %c0_56 = arith.constant 0 : index
    %c0_57 = arith.constant 0 : index
    %152 = vector.load %arg3[%c0_56, %c0_57] : memref<16x32xf32, #tpu.memory_space<vmem>>, vector<16x32xf32>
    tpu.vector_store %arg3[%c0_56, %c0_57], %151 {strides = array<i32>} : memref<16x32xf32, #tpu.memory_space<vmem>>, vector<16x32xf32>,
    return
  }
  func.func @transform_0(%arg0: i32) -> (i32, i32) {
    %c0_i32 = arith.constant 0 : i32
    %c0_i32_0 = arith.constant 0 : i32
    %c0_i32_1 = arith.constant 0 : i32
    return %c0_i32, %c0_i32_0 : i32, i32
  }
  func.func @transform_1(%arg0: i32) -> (i32, i32) {
    %c0_i32 = arith.constant 0 : i32
    %c0_i32_0 = arith.constant 0 : i32
    %c0_i32_1 = arith.constant 0 : i32
    return %c0_i32, %c0_i32_0 : i32, i32
  }
  func.func @transform_2(%arg0: i32) -> (i32, i32) {
    %c0_i32 = arith.constant 0 : i32
    %c0_i32_0 = arith.constant 0 : i32
    %c0_i32_1 = arith.constant 0 : i32
    return %c0_i32, %c0_i32_0 : i32, i32
  }
}

</mosaic_0001>

<llo_original>
// kernel: multi_scale_temporal_block.1
$region0: #{multi_scale_temporal_block.1}
  #allocation0 [shape = 'u32[]', space=smem, size = 0x4, offset = 0x4, fixed_abs, tag = 'smem constant byte address 0x4 - core index']
  #allocation1 [shape = 'u32[144,128]{1,0:T(1,128)}', space=vmem, size = 0x12000, scoped, tag = 'internal scratch']
  %s0 = inlined_call_operand.hbm [shape: f32[16,32], index: 0, kind: input, shape index: {}]
  %s1 = inlined_call_operand.hbm [shape: f32[584,128], index: 1, kind: input, shape index: {}]
  %s2 = inlined_call_operand.hbm [shape: f32[16,32], index: 2, kind: output, shape index: {}]
  %s3 = sld [smem:[#allocation0]]
  $region26: #{multi_scale_temporal_block.1} parent=0
    _
  %s5 = ssub.s32 1, %s3
  %s6 = scalar_select 0, %s5, %s3
  $region1: #{multi_scale_temporal_block.1} parent=0
    #allocation2 [shape = 'u8[8192]{0}', space=vmem, size = 0x2000, scoped, tag = 'input window, operand 0, single buffered']
    #allocation3 [shape = 's32[1]{0}', space=sflag, size = 0x4, scoped, tag = 'scoped memory for multi_scale_temporal_block.1']
    #allocation4 [shape = 's32[1]{0}', space=sflag, size = 0x4, scoped, tag = 'scoped memory for multi_scale_temporal_block.1']
    #allocation5 [shape = 'u8[299008]{0}', space=vmem, size = 0x49000, scoped, tag = 'input window, operand 1, single buffered']
    #allocation6 [shape = 's32[1]{0}', space=sflag, size = 0x4, scoped, tag = 'scoped memory for multi_scale_temporal_block.1']
    #allocation7 [shape = 'u8[8192]{0}', space=vmem, size = 0x2000, scoped, tag = 'output window, operand 0, single buffered']
    %7 = vsyncpa [#allocation3], 0
    %8 = vsyncpa [#allocation6], 0
    %9 = vsyncpa [#allocation4], 0
    // Predicated region
    $region2: #{multi_scale_temporal_block.1} parent=1 // pred_check
      _
    $region3: #{multi_scale_temporal_block.1} parent=1 // pred_check_branch
      %11 = sbr.rel (0) target = $region5
    $region4: #{multi_scale_temporal_block.1} parent=1 // pred_region
      %s13 = ssub.s32 256, 256
      %14 = vsyncadd [#allocation3], %s13
      %s15 = sshll.u32 [#allocation2], 4
      %s16 = int_to_ptr.vmem [resolvable:$true] %s15
      %21 = dma.hbm_to_vmem [thread:$0]  %s0, 256, %s16, [#allocation3], 128, 128, 8
    $region5: #{multi_scale_temporal_block.1} parent=1 // pred_fallthru
      _
    // Predicated region
    $region6: #{multi_scale_temporal_block.1} parent=1 // pred_check
      _
    $region7: #{multi_scale_temporal_block.1} parent=1 // pred_check_branch
      %23 = sbr.rel (0) target = $region9
    $region8: #{multi_scale_temporal_block.1} parent=1 // pred_region
      %s25 = ssub.s32 9344, 9344
      %26 = vsyncadd [#allocation6], %s25
      %s27 = sshll.u32 [#allocation5], 4
      %s28 = int_to_ptr.vmem [resolvable:$true] %s27
      %33 = dma.hbm_to_vmem [thread:$0]  %s1, 9344, %s28, [#allocation6], 128, 128, 8
    $region9: #{multi_scale_temporal_block.1} parent=1 // pred_fallthru
      _
    // Predicated region
    $region10: #{multi_scale_temporal_block.1} parent=1 // pred_check
      _
    $region11: #{multi_scale_temporal_block.1} parent=1 // pred_check_branch
      %35 = sbr.rel (0) target = $region13
    $region12: #{multi_scale_temporal_block.1} parent=1 // pred_region
      %36 = dma.done [#allocation3], 256
    $region13: #{multi_scale_temporal_block.1} parent=1 // pred_fallthru
      _
    // Predicated region
    $region14: #{multi_scale_temporal_block.1} parent=1 // pred_check
      _
    $region15: #{multi_scale_temporal_block.1} parent=1 // pred_check_branch
      %38 = sbr.rel (0) target = $region17
    $region16: #{multi_scale_temporal_block.1} parent=1 // pred_region
      %39 = dma.done [#allocation6], 9344
    $region17: #{multi_scale_temporal_block.1} parent=1 // pred_fallthru
      _
    %v40 = vld [vmem:[#allocation2] sm:$0xff]
    %v41 = vld [vmem:[#allocation2 + $0x8] sm:$0xff]
    %v42 = vrot.slane %v40, 7
    %v43 = vrot.slane %v41, 7
    %v44 = vlaneseq
    %v45 = vshrl.u32 %v44, 7
    %vm46 = vcmp.lt.s32.totalorder %v45, 1
    %v47 = vsel %vm46, %v42, %v43
    %v48 = vsel %vm46, %v43, %v42
    %v49 = vld [vmem:[#allocation5 + $0x228] sm:$0xff]
    %v50 = vld [vmem:[#allocation5 + $0x230] sm:$0xff]
    %v51 = vmul.f32 %v48, %v49
    %v52 = vmul.f32 %v47, %v50
    %v53 = vrot.slane %v40, 1
    %v54 = vrot.slane %v41, 1
    %vm55 = vcmp.lt.s32.totalorder %v45, 7
    %v56 = vsel %vm55, %v53, %v54
    %v57 = vsel %vm55, %v54, %v53
    %v58 = vld [vmem:[#allocation5 + $0x238] sm:$0xff]
    %v59 = vld [vmem:[#allocation5 + $0x240] sm:$0xff]
    %v60 = vmul.f32 %v56, %v58
    %v61 = vmul.f32 %v57, %v59
    %v62 = vld [vmem:[#allocation5 + $0x8] sm:$0xff]
    %v63 = vld [vmem:[#allocation5 + $0x10] sm:$0xff]
    %v64 = vld [vmem:[#allocation5 + $0x18] sm:$0xff]
    %v65 = vld [vmem:[#allocation5 + $0x20] sm:$0xff]
    %v66 = vld [vmem:[#allocation5 + $0x28] sm:$0xff]
    %v67 = vld [vmem:[#allocation5 + $0x30] sm:$0xff]
    %v68 = vld [vmem:[#allocation5 + $0x38] sm:$0xff]
    %v69 = vld [vmem:[#allocation5 + $0x40] sm:$0xff]
    %vm70 = vcmask 261120
    %v72 = vsel %vm70, %v40, 0
    %v75 = vsel %vm70, %v41, 0
    %77 = vmatprep.subr.mxu0 0.0
    %78 = vmatpush1.msra.mxu0 %v66
    %79 = vmatprep.subr.mxu0 0.0
    %80 = vmatpush1.msra.mxu0 %v67
    %81 = vmatprep.subr.mxu0 0.0
    %82 = vmatpush1.msra.mxu0 %v68
    %83 = vmatprep.subr.mxu0 0.0
    %84 = vmatpush1.msra.mxu0 %v69
    %85 = vmatprep.subr.mxu0 0.0
    %86 = vmatpush1.msra.mxu0 0.0
    %87 = vmatprep.subr.mxu0 0.0
    %88 = vmatpush1.msra.mxu0 0.0
    %89 = vmatprep.subr.mxu0 0.0
    %90 = vmatpush1.msra.mxu0 0.0
    %91 = vmatprep.subr.mxu0 0.0
    %92 = vmatpush1.msra.mxu0 0.0
    %93 = vmatprep.subr.mxu0 0.0
    %94 = vmatpush1.msra.mxu0 0.0
    %95 = vmatprep.subr.mxu0 0.0
    %96 = vmatpush1.msra.mxu0 0.0
    %97 = vmatprep.subr.mxu0 0.0
    %98 = vmatpush1.msra.mxu0 0.0
    %99 = vmatprep.subr.mxu0 0.0
    %100 = vmatpush1.msra.mxu0 0.0
    %101 = vmatprep.subr.mxu0 0.0
    %102 = vmatpush1.msra.mxu0 0.0
    %103 = vmatprep.subr.mxu0 0.0
    %104 = vmatpush1.msra.mxu0 0.0
    %105 = vmatprep.subr.mxu0 0.0
    %106 = vmatpush1.msra.mxu0 0.0
    %107 = vmatprep.subr.mxu0 0.0
    %108 = vmatpush1.msra.mxu0 0.0
    %109 = vmatprep.subr.mxu0 0.0
    %110 = vmatpush1.msra.mxu0 0.0
    %111 = vmatprep.subr.mxu0 0.0
    %112 = vmatpush1.msra.mxu0 0.0
    %113 = vmatprep.subr.mxu0 0.0
    %114 = vmatpush1.msra.mxu0 0.0
    %115 = vmatprep.subr.mxu0 0.0
    %116 = vmatpush1.msra.mxu0 0.0
    %117 = vmatprep.subr.mxu0 0.0
    %118 = vmatpush1.msra.mxu0 0.0
    %119 = vmatprep.subr.mxu0 0.0
    %120 = vmatpush1.msra.mxu0 0.0
    %121 = vmatprep.subr.mxu0 0.0
    %122 = vmatpush1.msra.mxu0 0.0
    %123 = vmatprep.subr.mxu0 0.0
    %124 = vmatpush1.msra.mxu0 0.0
    %125 = vmatprep.subr.mxu0 0.0
    %126 = vmatpush1.msra.mxu0 0.0
    %127 = vmatprep.subr.mxu0 0.0
    %128 = vmatpush1.msra.mxu0 0.0
    %129 = vmatprep.subr.mxu0 0.0
    %130 = vmatpush1.msra.mxu0 0.0
    %131 = vmatprep.subr.mxu0 0.0
    %132 = vmatpush1.msra.mxu0 0.0
    %133 = vmatprep.subr.mxu0 0.0
    %134 = vmatpush1.msra.mxu0 0.0
    %135 = vmatprep.subr.mxu0 0.0
    %136 = vmatpush1.msra.mxu0 0.0
    %137 = vmatprep.subr.mxu0 0.0
    %138 = vmatpush1.msra.mxu0 0.0
    %139 = vmatprep.subr.mxu0 0.0
    %140 = vmatpush1.msra.mxu0 0.0
    %141 = vmatprep.mubr.f32.mxu0 0.0
    %142 = vmatmul.mubr.f32.gmra.mrb[0].mxu0 %v72
    %v143 = vpop.f32.mrb[0].mxu0
    %v144 = vadd.f32 0.0, %v143
    %v145 = vpop.f32.mrb[0].mxu0
    %146 = vmatprep.mubr.f32.mxu0 0.0
    %147 = vmatmul.mubr.f32.gmra.mrb[0].mxu0 %v75
    %v148 = vpop.f32.mrb[0].mxu0
    %v149 = vadd.f32 0.0, %v148
    %v150 = vpop.f32.mrb[0].mxu0
    %151 = vdwg.mxu0
    %v153 = vsel %vm70, %v51, 0
    %v156 = vsel %vm70, %v52, 0
    %158 = vmatprep.subr.mxu0 0.0
    %159 = vmatpush1.msra.mxu0 %v62
    %160 = vmatprep.subr.mxu0 0.0
    %161 = vmatpush1.msra.mxu0 %v63
    %162 = vmatprep.subr.mxu0 0.0
    %163 = vmatpush1.msra.mxu0 %v64
    %164 = vmatprep.subr.mxu0 0.0
    %165 = vmatpush1.msra.mxu0 %v65
    %166 = vmatprep.subr.mxu0 0.0
    %167 = vmatpush1.msra.mxu0 0.0
    %168 = vmatprep.subr.mxu0 0.0
    %169 = vmatpush1.msra.mxu0 0.0
    %170 = vmatprep.subr.mxu0 0.0
    %171 = vmatpush1.msra.mxu0 0.0
    %172 = vmatprep.subr.mxu0 0.0
    %173 = vmatpush1.msra.mxu0 0.0
    %174 = vmatprep.subr.mxu0 0.0
    %175 = vmatpush1.msra.mxu0 0.0
    %176 = vmatprep.subr.mxu0 0.0
    %177 = vmatpush1.msra.mxu0 0.0
    %178 = vmatprep.subr.mxu0 0.0
    %179 = vmatpush1.msra.mxu0 0.0
    %180 = vmatprep.subr.mxu0 0.0
    %181 = vmatpush1.msra.mxu0 0.0
    %182 = vmatprep.subr.mxu0 0.0
    %183 = vmatpush1.msra.mxu0 0.0
    %184 = vmatprep.subr.mxu0 0.0
    %185 = vmatpush1.msra.mxu0 0.0
    %186 = vmatprep.subr.mxu0 0.0
    %187 = vmatpush1.msra.mxu0 0.0
    %188 = vmatprep.subr.mxu0 0.0
    %189 = vmatpush1.msra.mxu0 0.0
    %190 = vmatprep.subr.mxu0 0.0
    %191 = vmatpush1.msra.mxu0 0.0
    %192 = vmatprep.subr.mxu0 0.0
    %193 = vmatpush1.msra.mxu0 0.0
    %194 = vmatprep.subr.mxu0 0.0
    %195 = vmatpush1.msra.mxu0 0.0
    %196 = vmatprep.subr.mxu0 0.0
    %197 = vmatpush1.msra.mxu0 0.0
    %198 = vmatprep.subr.mxu0 0.0
    %199 = vmatpush1.msra.mxu0 0.0
    %200 = vmatprep.subr.mxu0 0.0
    %201 = vmatpush1.msra.mxu0 0.0
    %202 = vmatprep.subr.mxu0 0.0
    %203 = vmatpush1.msra.mxu0 0.0
    %204 = vmatprep.subr.mxu0 0.0
    %205 = vmatpush1.msra.mxu0 0.0
    %206 = vmatprep.subr.mxu0 0.0
    %207 = vmatpush1.msra.mxu0 0.0
    %208 = vmatprep.subr.mxu0 0.0
    %209 = vmatpush1.msra.mxu0 0.0
    %210 = vmatprep.subr.mxu0 0.0
    %211 = vmatpush1.msra.mxu0 0.0
    %212 = vmatprep.subr.mxu0 0.0
    %213 = vmatpush1.msra.mxu0 0.0
    %214 = vmatprep.subr.mxu0 0.0
    %215 = vmatpush1.msra.mxu0 0.0
    %216 = vmatprep.subr.mxu0 0.0
    %217 = vmatpush1.msra.mxu0 0.0
    %218 = vmatprep.subr.mxu0 0.0
    %219 = vmatpush1.msra.mxu0 0.0
    %220 = vmatprep.subr.mxu0 0.0
    %221 = vmatpush1.msra.mxu0 0.0
    %222 = vmatprep.mubr.f32.mxu0 0.0
    %223 = vmatmul.mubr.f32.gmra.mrb[0].mxu0 %v153
    %v224 = vpop.f32.mrb[0].mxu0
    %v225 = vadd.f32 %v144, %v224
    %v226 = vpop.f32.mrb[0].mxu0
    %227 = vmatprep.mubr.f32.mxu0 0.0
    %228 = vmatmul.mubr.f32.gmra.mrb[0].mxu0 %v156
    %v229 = vpop.f32.mrb[0].mxu0
    %v230 = vadd.f32 %v149, %v229
    %v231 = vpop.f32.mrb[0].mxu0
    %232 = vdwg.mxu0
    %v233 = vld [vmem:[#allocation5 + $0x48] sm:$0xff]
    %v234 = vld [vmem:[#allocation5 + $0x50] sm:$0xff]
    %v235 = vld [vmem:[#allocation5 + $0x58] sm:$0xff]
    %v236 = vld [vmem:[#allocation5 + $0x60] sm:$0xff]
    %v238 = vsel %vm70, %v60, 0
    %v241 = vsel %vm70, %v61, 0
    %243 = vmatprep.subr.mxu0 0.0
    %244 = vmatpush1.msra.mxu0 %v233
    %245 = vmatprep.subr.mxu0 0.0
    %246 = vmatpush1.msra.mxu0 %v234
    %247 = vmatprep.subr.mxu0 0.0
    %248 = vmatpush1.msra.mxu0 %v235
    %249 = vmatprep.subr.mxu0 0.0
    %250 = vmatpush1.msra.mxu0 %v236
    %251 = vmatprep.subr.mxu0 0.0
    %252 = vmatpush1.msra.mxu0 0.0
    %253 = vmatprep.subr.mxu0 0.0
    %254 = vmatpush1.msra.mxu0 0.0
    %255 = vmatprep.subr.mxu0 0.0
    %256 = vmatpush1.msra.mxu0 0.0
    %257 = vmatprep.subr.mxu0 0.0
    %258 = vmatpush1.msra.mxu0 0.0
    %259 = vmatprep.subr.mxu0 0.0
    %260 = vmatpush1.msra.mxu0 0.0
    %261 = vmatprep.subr.mxu0 0.0
    %262 = vmatpush1.msra.mxu0 0.0
    %263 = vmatprep.subr.mxu0 0.0
    %264 = vmatpush1.msra.mxu0 0.0
    %265 = vmatprep.subr.mxu0 0.0
    %266 = vmatpush1.msra.mxu0 0.0
    %267 = vmatprep.subr.mxu0 0.0
    %268 = vmatpush1.msra.mxu0 0.0
    %269 = vmatprep.subr.mxu0 0.0
    %270 = vmatpush1.msra.mxu0 0.0
    %271 = vmatprep.subr.mxu0 0.0
    %272 = vmatpush1.msra.mxu0 0.0
    %273 = vmatprep.subr.mxu0 0.0
    %274 = vmatpush1.msra.mxu0 0.0
    %275 = vmatprep.subr.mxu0 0.0
    %276 = vmatpush1.msra.mxu0 0.0
    %277 = vmatprep.subr.mxu0 0.0
    %278 = vmatpush1.msra.mxu0 0.0
    %279 = vmatprep.subr.mxu0 0.0
    %280 = vmatpush1.msra.mxu0 0.0
    %281 = vmatprep.subr.mxu0 0.0
    %282 = vmatpush1.msra.mxu0 0.0
    %283 = vmatprep.subr.mxu0 0.0
    %284 = vmatpush1.msra.mxu0 0.0
    %285 = vmatprep.subr.mxu0 0.0
    %286 = vmatpush1.msra.mxu0 0.0
    %287 = vmatprep.subr.mxu0 0.0
    %288 = vmatpush1.msra.mxu0 0.0
    %289 = vmatprep.subr.mxu0 0.0
    %290 = vmatpush1.msra.mxu0 0.0
    %291 = vmatprep.subr.mxu0 0.0
    %292 = vmatpush1.msra.mxu0 0.0
    %293 = vmatprep.subr.mxu0 0.0
    %294 = vmatpush1.msra.mxu0 0.0
    %295 = vmatprep.subr.mxu0 0.0
    %296 = vmatpush1.msra.mxu0 0.0
    %297 = vmatprep.subr.mxu0 0.0
    %298 = vmatpush1.msra.mxu0 0.0
    %299 = vmatprep.subr.mxu0 0.0
    %300 = vmatpush1.msra.mxu0 0.0
    %301 = vmatprep.subr.mxu0 0.0
    %302 = vmatpush1.msra.mxu0 0.0
    %303 = vmatprep.subr.mxu0 0.0
    %304 = vmatpush1.msra.mxu0 0.0
    %305 = vmatprep.subr.mxu0 0.0
    %306 = vmatpush1.msra.mxu0 0.0
    %307 = vmatprep.mubr.f32.mxu0 0.0
    %308 = vmatmul.mubr.f32.gmra.mrb[0].mxu0 %v238
    %v309 = vpop.f32.mrb[0].mxu0
    %v310 = vadd.f32 0.0, %v309
    %v311 = vpop.f32.mrb[0].mxu0
    %312 = vmatprep.mubr.f32.mxu0 0.0
    %313 = vmatmul.mubr.f32.gmra.mrb[0].mxu0 %v241
    %v314 = vpop.f32.mrb[0].mxu0
    %v315 = vadd.f32 0.0, %v314
    %v316 = vpop.f32.mrb[0].mxu0
    %317 = vdwg.mxu0
    %v318 = vadd.f32 %v225, %v310
    %v319 = vadd.f32 %v230, %v315
    %v320 = vld [vmem:[#allocation5] sm:$0x1]
    %v321 = vlaneseq
    %v322 = vshrl.u32 %v321, 7
    %v323 = vsub.s32 0, %v322
    %v324 = vrot.slane %v320, %v323
    %v325 = vadd.f32 %v318, %v324
    %v326 = vadd.f32 %v319, %v324
    %v327 = vld [vmem:[#allocation5 + $0x1] sm:$0x1]
    %v328 = vld [vmem:[#allocation5 + $0x2] sm:$0x1]
    %329 = vadd.xlane.f32.xlu0 %v325
    %v330 = vpop.xlane.xlu0 %329
    %331 = vadd.xlane.f32.xlu0 %v326
    %v332 = vpop.xlane.xlu0 %331
    %v333 = vrcp.pop 128.0
    %v334 = vmul.f32 %v330, %v333
    %v335 = vmul.f32 %v332, %v333
    %v336 = vsub.f32 %v325, %v334
    %v337 = vsub.f32 %v326, %v335
    %v338 = vmul.f32 %v336, %v336
    %v339 = vmul.f32 %v337, %v337
    %340 = vadd.xlane.f32.xlu0 %v338
    %v341 = vpop.xlane.xlu0 %340
    %342 = vadd.xlane.f32.xlu0 %v339
    %v343 = vpop.xlane.xlu0 %342
    %v344 = vmul.f32 %v341, %v333
    %v345 = vmul.f32 %v343, %v333
    %v346 = vadd.f32 %v344, 1e-05
    %v347 = vadd.f32 %v345, 1e-05
    %v348 = vrsqrt.pop %v346
    %v349 = vrsqrt.pop %v347
    %v350 = vmul.f32 %v336, %v348
    %v351 = vmul.f32 %v337, %v349
    %v352 = vlaneseq
    %v353 = vshrl.u32 %v352, 7
    %v354 = vsub.s32 0, %v353
    %v355 = vrot.slane %v327, %v354
    %v356 = vmul.f32 %v350, %v355
    %v357 = vmul.f32 %v351, %v355
    %v358 = vlaneseq
    %v359 = vshrl.u32 %v358, 7
    %v360 = vsub.s32 0, %v359
    %v361 = vrot.slane %v328, %v360
    %v362 = vadd.f32 %v356, %v361
    %v363 = vadd.f32 %v357, %v361
    %v364 = vmul.f32 %v362, 0.5
    %v365 = vmul.f32 %v363, 0.5
    %v366 = vmul.f32 %v362, 0.70710677
    %v367 = vmul.f32 %v363, 0.70710677
    %v368 = vand.u32 2147483647, %v366
    %v369 = vand.u32 2147483647, %v367
    %v370 = vmul.f32 %v368, 0.3275911
    %v371 = vmul.f32 %v369, 0.3275911
    %v372 = vadd.f32 %v370, 1.0
    %v373 = vadd.f32 %v371, 1.0
    %v374 = vrcp.pop %v372
    %v375 = vmul.f32 1.0, %v374
    %v376 = vrcp.pop %v373
    %v377 = vmul.f32 1.0, %v376
    %v378 = vmul.f32 %v375, 1.0614054
    %v379 = vmul.f32 %v377, 1.0614054
    %v380 = vadd.f32 %v378, -1.4531521
    %v381 = vadd.f32 %v379, -1.4531521
    %v382 = vmul.f32 %v380, %v375
    %v383 = vmul.f32 %v381, %v377
    %v384 = vadd.f32 %v382, 1.4214138
    %v385 = vadd.f32 %v383, 1.4214138
    %v386 = vmul.f32 %v384, %v375
    %v387 = vmul.f32 %v385, %v377
    %v388 = vadd.f32 %v386, -0.28449672
    %v389 = vadd.f32 %v387, -0.28449672
    %v390 = vmul.f32 %v388, %v375
    %v391 = vmul.f32 %v389, %v377
    %v392 = vadd.f32 %v390, 0.2548296
    %v393 = vadd.f32 %v391, 0.2548296
    %v394 = vmul.f32 %v392, %v375
    %v395 = vmul.f32 %v393, %v377
    %v396 = vsub.f32 0.0, %v368
    %v397 = vsub.f32 0.0, %v369
    %v398 = vmul.f32 %v396, %v368
    %v399 = vmul.f32 %v397, %v369
    %v400 = vmul.f32 %v398, 1.442695
    %v401 = vpow.pop %v400
    %v402 = vmul.f32 %v399, 1.442695
    %v403 = vpow.pop %v402
    %v404 = vmul.f32 %v394, %v401
    %v405 = vmul.f32 %v395, %v403
    %v406 = vsub.f32 1.0, %v404
    %v407 = vsub.f32 1.0, %v405
    %vm408 = vcmp.lt.f32.partialorder %v366, 0.0
    %vm409 = vcmp.lt.f32.partialorder %v367, 0.0
    %v410 = vsub.f32 0.0, %v406
    %v411 = vsub.f32 0.0, %v407
    %v412 = vsel %vm408, %v410, %v406
    %v413 = vsel %vm409, %v411, %v407
    %v414 = vadd.f32 %v412, 1.0
    %v415 = vadd.f32 %v413, 1.0
    %v416 = vmul.f32 %v364, %v414
    %v417 = vmul.f32 %v365, %v415
    %v418 = vld [vmem:[#allocation5 + $0x88] sm:$0xff]
    %v419 = vld [vmem:[#allocation5 + $0x90] sm:$0xff]
    %v420 = vld [vmem:[#allocation5 + $0x98] sm:$0xff]
    %v421 = vld [vmem:[#allocation5 + $0xa0] sm:$0xff]
    %v422 = vld [vmem:[#allocation5 + $0xa8] sm:$0xff]
    %v423 = vld [vmem:[#allocation5 + $0xb0] sm:$0xff]
    %v424 = vld [vmem:[#allocation5 + $0xb8] sm:$0xff]
    %v425 = vld [vmem:[#allocation5 + $0xc0] sm:$0xff]
    %v426 = vld [vmem:[#allocation5 + $0xc8] sm:$0xff]
    %v427 = vld [vmem:[#allocation5 + $0xd0] sm:$0xff]
    %v428 = vld [vmem:[#allocation5 + $0xd8] sm:$0xff]
    %v429 = vld [vmem:[#allocation5 + $0xe0] sm:$0xff]
    %v430 = vld [vmem:[#allocation5 + $0xe8] sm:$0xff]
    %v431 = vld [vmem:[#allocation5 + $0xf0] sm:$0xff]
    %v432 = vld [vmem:[#allocation5 + $0xf8] sm:$0xff]
    %v433 = vld [vmem:[#allocation5 + $0x100] sm:$0xff]
    %v434 = vld [vmem:[#allocation5 + $0x4] sm:$0x1]
    %v435 = vlaneseq
    %v436 = vshrl.u32 %v435, 7
    %v437 = vsub.s32 0, %v436
    %v438 = vrot.slane %v434, %v437
    %439 = vmatprep.subr.mxu0 0.0
    %440 = vmatpush1.msra.mxu0 %v418
    %441 = vmatprep.subr.mxu0 0.0
    %442 = vmatpush1.msra.mxu0 %v419
    %443 = vmatprep.subr.mxu0 0.0
    %444 = vmatpush1.msra.mxu0 %v420
    %445 = vmatprep.subr.mxu0 0.0
    %446 = vmatpush1.msra.mxu0 %v421
    %447 = vmatprep.subr.mxu0 0.0
    %448 = vmatpush1.msra.mxu0 %v422
    %449 = vmatprep.subr.mxu0 0.0
    %450 = vmatpush1.msra.mxu0 %v423
    %451 = vmatprep.subr.mxu0 0.0
    %452 = vmatpush1.msra.mxu0 %v424
    %453 = vmatprep.subr.mxu0 0.0
    %454 = vmatpush1.msra.mxu0 %v425
    %455 = vmatprep.subr.mxu0 0.0
    %456 = vmatpush1.msra.mxu0 %v426
    %457 = vmatprep.subr.mxu0 0.0
    %458 = vmatpush1.msra.mxu0 %v427
    %459 = vmatprep.subr.mxu0 0.0
    %460 = vmatpush1.msra.mxu0 %v428
    %461 = vmatprep.subr.mxu0 0.0
    %462 = vmatpush1.msra.mxu0 %v429
    %463 = vmatprep.subr.mxu0 0.0
    %464 = vmatpush1.msra.mxu0 %v430
    %465 = vmatprep.subr.mxu0 0.0
    %466 = vmatpush1.msra.mxu0 %v431
    %467 = vmatprep.subr.mxu0 0.0
    %468 = vmatpush1.msra.mxu0 %v432
    %469 = vmatprep.subr.mxu0 0.0
    %470 = vmatpush1.msra.mxu0 %v433
    %471 = vmatprep.subr.mxu0 0.0
    %472 = vmatpush1.msra.mxu0 0.0
    %473 = vmatprep.subr.mxu0 0.0
    %474 = vmatpush1.msra.mxu0 0.0
    %475 = vmatprep.subr.mxu0 0.0
    %476 = vmatpush1.msra.mxu0 0.0
    %477 = vmatprep.subr.mxu0 0.0
    %478 = vmatpush1.msra.mxu0 0.0
    %479 = vmatprep.subr.mxu0 0.0
    %480 = vmatpush1.msra.mxu0 0.0
    %481 = vmatprep.subr.mxu0 0.0
    %482 = vmatpush1.msra.mxu0 0.0
    %483 = vmatprep.subr.mxu0 0.0
    %484 = vmatpush1.msra.mxu0 0.0
    %485 = vmatprep.subr.mxu0 0.0
    %486 = vmatpush1.msra.mxu0 0.0
    %487 = vmatprep.subr.mxu0 0.0
    %488 = vmatpush1.msra.mxu0 0.0
    %489 = vmatprep.subr.mxu0 0.0
    %490 = vmatpush1.msra.mxu0 0.0
    %491 = vmatprep.subr.mxu0 0.0
    %492 = vmatpush1.msra.mxu0 0.0
    %493 = vmatprep.subr.mxu0 0.0
    %494 = vmatpush1.msra.mxu0 0.0
    %495 = vmatprep.subr.mxu0 0.0
    %496 = vmatpush1.msra.mxu0 0.0
    %497 = vmatprep.subr.mxu0 0.0
    %498 = vmatpush1.msra.mxu0 0.0
    %499 = vmatprep.subr.mxu0 0.0
    %500 = vmatpush1.msra.mxu0 0.0
    %501 = vmatprep.subr.mxu0 0.0
    %502 = vmatpush1.msra.mxu0 0.0
    %503 = vmatprep.mubr.f32.mxu0 0.0
    %504 = vmatmul.mubr.f32.gmra.mrb[0].mxu0 %v416
    %v505 = vpop.f32.mrb[0].mxu0
    %v506 = vadd.f32 %v438, %v505
    %v507 = vpop.f32.mrb[0].mxu0
    %508 = vmatprep.mubr.f32.mxu0 0.0
    %509 = vmatmul.mubr.f32.gmra.mrb[0].mxu0 %v417
    %v510 = vpop.f32.mrb[0].mxu0
    %v511 = vadd.f32 %v438, %v510
    %v512 = vpop.f32.mrb[0].mxu0
    %513 = vdwg.mxu0
    %v514 = vld [vmem:[#allocation5 + $0x5] sm:$0x1]
    %v515 = vld [vmem:[#allocation5 + $0x6] sm:$0x1]
    %v516 = vsel %vm70, %v40, 0.0
    %517 = vadd.xlane.f32.xlu0 %v516
    %v518 = vpop.xlane.xlu0 %517
    %v519 = vsel %vm70, %v41, 0.0
    %520 = vadd.xlane.f32.xlu0 %v519
    %v521 = vpop.xlane.xlu0 %520
    %v522 = vrcp.pop 32.0
    %v523 = vmul.f32 %v518, %v522
    %v524 = vmul.f32 %v521, %v522
    %v525 = vsub.f32 %v40, %v523
    %v526 = vsub.f32 %v41, %v524
    %v527 = vmul.f32 %v525, %v525
    %v528 = vmul.f32 %v526, %v526
    %v529 = vsel %vm70, %v527, 0.0
    %530 = vadd.xlane.f32.xlu0 %v529
    %v531 = vpop.xlane.xlu0 %530
    %v532 = vsel %vm70, %v528, 0.0
    %533 = vadd.xlane.f32.xlu0 %v532
    %v534 = vpop.xlane.xlu0 %533
    %v535 = vmul.f32 %v531, %v522
    %v536 = vmul.f32 %v534, %v522
    %v537 = vadd.f32 %v535, 1e-05
    %v538 = vadd.f32 %v536, 1e-05
    %v539 = vrsqrt.pop %v537
    %v540 = vrsqrt.pop %v538
    %v541 = vmul.f32 %v525, %v539
    %v542 = vmul.f32 %v526, %v540
    %v543 = vlaneseq
    %v544 = vshrl.u32 %v543, 7
    %v545 = vsub.s32 0, %v544
    %v546 = vrot.slane %v514, %v545
    %v547 = vmul.f32 %v541, %v546
    %v548 = vmul.f32 %v542, %v546
    %v549 = vlaneseq
    %v550 = vshrl.u32 %v549, 7
    %v551 = vsub.s32 0, %v550
    %v552 = vrot.slane %v515, %v551
    %v553 = vadd.f32 %v547, %v552
    %v554 = vadd.f32 %v548, %v552
    %v555 = vld [vmem:[#allocation5 + $0x68] sm:$0xff]
    %v556 = vld [vmem:[#allocation5 + $0x70] sm:$0xff]
    %v557 = vld [vmem:[#allocation5 + $0x78] sm:$0xff]
    %v558 = vld [vmem:[#allocation5 + $0x80] sm:$0xff]
    %v559 = vld [vmem:[#allocation5 + $0x3] sm:$0x1]
    %v560 = vlaneseq
    %v561 = vshrl.u32 %v560, 7
    %v562 = vsub.s32 0, %v561
    %v563 = vrot.slane %v559, %v562
    %v565 = vsel %vm70, %v553, 0
    %v568 = vsel %vm70, %v554, 0
    %570 = vmatprep.subr.mxu0 0.0
    %571 = vmatpush1.msra.mxu0 %v555
    %572 = vmatprep.subr.mxu0 0.0
    %573 = vmatpush1.msra.mxu0 %v556
    %574 = vmatprep.subr.mxu0 0.0
    %575 = vmatpush1.msra.mxu0 %v557
    %576 = vmatprep.subr.mxu0 0.0
    %577 = vmatpush1.msra.mxu0 %v558
    %578 = vmatprep.subr.mxu0 0.0
    %579 = vmatpush1.msra.mxu0 0.0
    %580 = vmatprep.subr.mxu0 0.0
    %581 = vmatpush1.msra.mxu0 0.0
    %582 = vmatprep.subr.mxu0 0.0
    %583 = vmatpush1.msra.mxu0 0.0
    %584 = vmatprep.subr.mxu0 0.0
    %585 = vmatpush1.msra.mxu0 0.0
    %586 = vmatprep.subr.mxu0 0.0
    %587 = vmatpush1.msra.mxu0 0.0
    %588 = vmatprep.subr.mxu0 0.0
    %589 = vmatpush1.msra.mxu0 0.0
    %590 = vmatprep.subr.mxu0 0.0
    %591 = vmatpush1.msra.mxu0 0.0
    %592 = vmatprep.subr.mxu0 0.0
    %593 = vmatpush1.msra.mxu0 0.0
    %594 = vmatprep.subr.mxu0 0.0
    %595 = vmatpush1.msra.mxu0 0.0
    %596 = vmatprep.subr.mxu0 0.0
    %597 = vmatpush1.msra.mxu0 0.0
    %598 = vmatprep.subr.mxu0 0.0
    %599 = vmatpush1.msra.mxu0 0.0
    %600 = vmatprep.subr.mxu0 0.0
    %601 = vmatpush1.msra.mxu0 0.0
    %602 = vmatprep.subr.mxu0 0.0
    %603 = vmatpush1.msra.mxu0 0.0
    %604 = vmatprep.subr.mxu0 0.0
    %605 = vmatpush1.msra.mxu0 0.0
    %606 = vmatprep.subr.mxu0 0.0
    %607 = vmatpush1.msra.mxu0 0.0
    %608 = vmatprep.subr.mxu0 0.0
    %609 = vmatpush1.msra.mxu0 0.0
    %610 = vmatprep.subr.mxu0 0.0
    %611 = vmatpush1.msra.mxu0 0.0
    %612 = vmatprep.subr.mxu0 0.0
    %613 = vmatpush1.msra.mxu0 0.0
    %614 = vmatprep.subr.mxu0 0.0
    %615 = vmatpush1.msra.mxu0 0.0
    %616 = vmatprep.subr.mxu0 0.0
    %617 = vmatpush1.msra.mxu0 0.0
    %618 = vmatprep.subr.mxu0 0.0
    %619 = vmatpush1.msra.mxu0 0.0
    %620 = vmatprep.subr.mxu0 0.0
    %621 = vmatpush1.msra.mxu0 0.0
    %622 = vmatprep.subr.mxu0 0.0
    %623 = vmatpush1.msra.mxu0 0.0
    %624 = vmatprep.subr.mxu0 0.0
    %625 = vmatpush1.msra.mxu0 0.0
    %626 = vmatprep.subr.mxu0 0.0
    %627 = vmatpush1.msra.mxu0 0.0
    %628 = vmatprep.subr.mxu0 0.0
    %629 = vmatpush1.msra.mxu0 0.0
    %630 = vmatprep.subr.mxu0 0.0
    %631 = vmatpush1.msra.mxu0 0.0
    %632 = vmatprep.subr.mxu0 0.0
    %633 = vmatpush1.msra.mxu0 0.0
    %634 = vmatprep.mubr.f32.mxu0 0.0
    %635 = vmatmul.mubr.f32.gmra.mrb[0].mxu0 %v565
    %v636 = vpop.f32.mrb[0].mxu0
    %v637 = vadd.f32 %v563, %v636
    %v638 = vpop.f32.mrb[0].mxu0
    %639 = vmatprep.mubr.f32.mxu0 0.0
    %640 = vmatmul.mubr.f32.gmra.mrb[0].mxu0 %v568
    %v641 = vpop.f32.mrb[0].mxu0
    %v642 = vadd.f32 %v563, %v641
    %v643 = vpop.f32.mrb[0].mxu0
    %644 = vdwg.mxu0
    %v645 = vld [vmem:[#allocation5 + $0x1a8] sm:$0xff]
    %v646 = vld [vmem:[#allocation5 + $0x1b0] sm:$0xff]
    %v647 = vld [vmem:[#allocation5 + $0x1b8] sm:$0xff]
    %v648 = vld [vmem:[#allocation5 + $0x1c0] sm:$0xff]
    %v649 = vld [vmem:[#allocation5 + $0x1c8] sm:$0xff]
    %v650 = vld [vmem:[#allocation5 + $0x1d0] sm:$0xff]
    %v651 = vld [vmem:[#allocation5 + $0x1d8] sm:$0xff]
    %v652 = vld [vmem:[#allocation5 + $0x1e0] sm:$0xff]
    %v653 = vld [vmem:[#allocation5 + $0x1e8] sm:$0xff]
    %v654 = vld [vmem:[#allocation5 + $0x1f0] sm:$0xff]
    %v655 = vld [vmem:[#allocation5 + $0x1f8] sm:$0xff]
    %v656 = vld [vmem:[#allocation5 + $0x200] sm:$0xff]
    %v657 = vld [vmem:[#allocation5 + $0x208] sm:$0xff]
    %v658 = vld [vmem:[#allocation5 + $0x210] sm:$0xff]
    %v659 = vld [vmem:[#allocation5 + $0x218] sm:$0xff]
    %v660 = vld [vmem:[#allocation5 + $0x220] sm:$0xff]
    %v661 = vmul.f32 %v637, %v645
    %v662 = vmul.f32 %v642, %v646
    %v663 = vmul.f32 %v637, %v647
    %v664 = vmul.f32 %v642, %v648
    %v665 = vmul.f32 %v637, %v649
    %v666 = vmul.f32 %v642, %v650
    %v667 = vmul.f32 %v637, %v651
    %v668 = vmul.f32 %v642, %v652
    %v669 = vmul.f32 %v637, %v653
    %v670 = vmul.f32 %v642, %v654
    %v671 = vmul.f32 %v637, %v655
    %v672 = vmul.f32 %v642, %v656
    %v673 = vmul.f32 %v637, %v657
    %v674 = vmul.f32 %v642, %v658
    %v675 = vmul.f32 %v637, %v659
    %v676 = vmul.f32 %v642, %v660
    %v677 = vxor.u32 %v637, 2147483648
    %v678 = vxor.u32 %v642, 2147483648
    %v679 = vmul.f32 %v677, 1.442695
    %v680 = vpow.pop %v679
    %v681 = vmul.f32 %v678, 1.442695
    %v682 = vpow.pop %v681
    %v683 = vadd.f32 %v680, 1.0
    %v684 = vadd.f32 %v682, 1.0
    %v685 = vrcp.pop %v683
    %v686 = vmul.f32 1.0, %v685
    %v687 = vrcp.pop %v684
    %v688 = vmul.f32 1.0, %v687
    %705 = vrot.lane.b32.xlu0 %v645, 96
    %v706 = vpop.permute.xlu0 %705
    %707 = vrot.lane.b32.xlu0 %v646, 96
    %v708 = vpop.permute.xlu0 %707
    %709 = vrot.lane.b32.xlu0 %v647, 96
    %v710 = vpop.permute.xlu0 %709
    %711 = vrot.lane.b32.xlu0 %v648, 96
    %v712 = vpop.permute.xlu0 %711
    %713 = vrot.lane.b32.xlu0 %v649, 96
    %v714 = vpop.permute.xlu0 %713
    %715 = vrot.lane.b32.xlu0 %v650, 96
    %v716 = vpop.permute.xlu0 %715
    %717 = vrot.lane.b32.xlu0 %v651, 96
    %v718 = vpop.permute.xlu0 %717
    %719 = vrot.lane.b32.xlu0 %v652, 96
    %v720 = vpop.permute.xlu0 %719
    %721 = vrot.lane.b32.xlu0 %v653, 96
    %v722 = vpop.permute.xlu0 %721
    %723 = vrot.lane.b32.xlu0 %v654, 96
    %v724 = vpop.permute.xlu0 %723
    %725 = vrot.lane.b32.xlu0 %v655, 96
    %v726 = vpop.permute.xlu0 %725
    %727 = vrot.lane.b32.xlu0 %v656, 96
    %v728 = vpop.permute.xlu0 %727
    %729 = vrot.lane.b32.xlu0 %v657, 96
    %v730 = vpop.permute.xlu0 %729
    %731 = vrot.lane.b32.xlu0 %v658, 96
    %v732 = vpop.permute.xlu0 %731
    %733 = vrot.lane.b32.xlu0 %v659, 96
    %v734 = vpop.permute.xlu0 %733
    %735 = vrot.lane.b32.xlu0 %v660, 96
    %v736 = vpop.permute.xlu0 %735
    %v753 = vmul.f32 %v686, %v706
    %v754 = vmul.f32 %v688, %v708
    %v755 = vmul.f32 %v686, %v710
    %v756 = vmul.f32 %v688, %v712
    %v757 = vmul.f32 %v686, %v714
    %v758 = vmul.f32 %v688, %v716
    %v759 = vmul.f32 %v686, %v718
    %v760 = vmul.f32 %v688, %v720
    %v761 = vmul.f32 %v686, %v722
    %v762 = vmul.f32 %v688, %v724
    %v763 = vmul.f32 %v686, %v726
    %v764 = vmul.f32 %v688, %v728
    %v765 = vmul.f32 %v686, %v730
    %v766 = vmul.f32 %v688, %v732
    %v767 = vmul.f32 %v686, %v734
    %v768 = vmul.f32 %v688, %v736
    %v769 = vld [vmem:[#allocation5 + $0x128] sm:$0xff]
    %v770 = vld [vmem:[#allocation5 + $0x130] sm:$0xff]
    %v771 = vld [vmem:[#allocation5 + $0x138] sm:$0xff]
    %v772 = vld [vmem:[#allocation5 + $0x140] sm:$0xff]
    %v773 = vld [vmem:[#allocation5 + $0x148] sm:$0xff]
    %v774 = vld [vmem:[#allocation5 + $0x150] sm:$0xff]
    %v775 = vld [vmem:[#allocation5 + $0x158] sm:$0xff]
    %v776 = vld [vmem:[#allocation5 + $0x160] sm:$0xff]
    %v777 = vld [vmem:[#allocation5 + $0x168] sm:$0xff]
    %v778 = vld [vmem:[#allocation5 + $0x170] sm:$0xff]
    %v779 = vld [vmem:[#allocation5 + $0x178] sm:$0xff]
    %v780 = vld [vmem:[#allocation5 + $0x180] sm:$0xff]
    %v781 = vld [vmem:[#allocation5 + $0x188] sm:$0xff]
    %v782 = vld [vmem:[#allocation5 + $0x190] sm:$0xff]
    %v783 = vld [vmem:[#allocation5 + $0x198] sm:$0xff]
    %v784 = vld [vmem:[#allocation5 + $0x1a0] sm:$0xff]
    %787 = vrot.lane.b32.xlu0 %v637, 96
    %v788 = vpop.permute.xlu0 %787
    %789 = vrot.lane.b32.xlu0 %v642, 96
    %v790 = vpop.permute.xlu0 %789
    %v792 = vsel %vm70, %v661, 0
    %v795 = vsel %vm70, %v662, 0
    %v798 = vsel %vm70, %v663, 0
    %v801 = vsel %vm70, %v664, 0
    %v804 = vsel %vm70, %v665, 0
    %v807 = vsel %vm70, %v666, 0
    %v810 = vsel %vm70, %v667, 0
    %v813 = vsel %vm70, %v668, 0
    %v816 = vsel %vm70, %v669, 0
    %v819 = vsel %vm70, %v670, 0
    %v822 = vsel %vm70, %v671, 0
    %v825 = vsel %vm70, %v672, 0
    %v828 = vsel %vm70, %v673, 0
    %v831 = vsel %vm70, %v674, 0
    %v834 = vsel %vm70, %v675, 0
    %v837 = vsel %vm70, %v676, 0
    %v839 = vsel %vm70, %v788, 0
    %v841 = vsel %vm70, %v790, 0
    %843 = vmatprep.subr.mxu0 0.0
    %844 = vmatpush1.xpose.msra.mxu0 %v839
    %845 = vmatprep.subr.mxu0 0.0
    %846 = vmatpush1.xpose.msra.mxu0 %v841
    %847 = vmatprep.subr.mxu0 0.0
    %848 = vmatpush1.xpose.msra.mxu0 0.0
    %849 = vmatprep.subr.mxu0 0.0
    %850 = vmatpush1.xpose.msra.mxu0 0.0
    %851 = vmatprep.subr.mxu0 0.0
    %852 = vmatpush1.xpose.msra.mxu0 0.0
    %853 = vmatprep.subr.mxu0 0.0
    %854 = vmatpush1.xpose.msra.mxu0 0.0
    %855 = vmatprep.subr.mxu0 0.0
    %856 = vmatpush1.xpose.msra.mxu0 0.0
    %857 = vmatprep.subr.mxu0 0.0
    %858 = vmatpush1.xpose.msra.mxu0 0.0
    %859 = vmatprep.subr.mxu0 0.0
    %860 = vmatpush1.xpose.msra.mxu0 0.0
    %861 = vmatprep.subr.mxu0 0.0
    %862 = vmatpush1.xpose.msra.mxu0 0.0
    %863 = vmatprep.subr.mxu0 0.0
    %864 = vmatpush1.xpose.msra.mxu0 0.0
    %865 = vmatprep.subr.mxu0 0.0
    %866 = vmatpush1.xpose.msra.mxu0 0.0
    %867 = vmatprep.subr.mxu0 0.0
    %868 = vmatpush1.xpose.msra.mxu0 0.0
    %869 = vmatprep.subr.mxu0 0.0
    %870 = vmatpush1.xpose.msra.mxu0 0.0
    %871 = vmatprep.subr.mxu0 0.0
    %872 = vmatpush1.xpose.msra.mxu0 0.0
    %873 = vmatprep.subr.mxu0 0.0
    %874 = vmatpush1.xpose.msra.mxu0 0.0
    %875 = vmatprep.subr.mxu0 0.0
    %876 = vmatpush1.xpose.msra.mxu0 0.0
    %877 = vmatprep.subr.mxu0 0.0
    %878 = vmatpush1.xpose.msra.mxu0 0.0
    %879 = vmatprep.subr.mxu0 0.0
    %880 = vmatpush1.xpose.msra.mxu0 0.0
    %881 = vmatprep.subr.mxu0 0.0
    %882 = vmatpush1.xpose.msra.mxu0 0.0
    %883 = vmatprep.subr.mxu0 0.0
    %884 = vmatpush1.xpose.msra.mxu0 0.0
    %885 = vmatprep.subr.mxu0 0.0
    %886 = vmatpush1.xpose.msra.mxu0 0.0
    %887 = vmatprep.subr.mxu0 0.0
    %888 = vmatpush1.xpose.msra.mxu0 0.0
    %889 = vmatprep.subr.mxu0 0.0
    %890 = vmatpush1.xpose.msra.mxu0 0.0
    %891 = vmatprep.subr.mxu0 0.0
    %892 = vmatpush1.xpose.msra.mxu0 0.0
    %893 = vmatprep.subr.mxu0 0.0
    %894 = vmatpush1.xpose.msra.mxu0 0.0
    %895 = vmatprep.subr.mxu0 0.0
    %896 = vmatpush1.xpose.msra.mxu0 0.0
    %897 = vmatprep.subr.mxu0 0.0
    %898 = vmatpush1.xpose.msra.mxu0 0.0
    %899 = vmatprep.subr.mxu0 0.0
    %900 = vmatpush1.xpose.msra.mxu0 0.0
    %901 = vmatprep.subr.mxu0 0.0
    %902 = vmatpush1.xpose.msra.mxu0 0.0
    %903 = vmatprep.subr.mxu0 0.0
    %904 = vmatpush1.xpose.msra.mxu0 0.0
    %905 = vmatprep.subr.mxu0 0.0
    %906 = vmatpush1.xpose.msra.mxu0 0.0
    %907 = vmatprep.mubr.f32.mxu0 0.0
    %908 = vmatmul.mubr.f32.gmra.mrb[0].mxu0 %v792
    %v909 = vpop.f32.mrb[0].mxu0
    %v910 = vadd.f32 %v769, %v909
    %v911 = vpop.f32.mrb[0].mxu0
    %912 = vmatprep.mubr.f32.mxu0 0.0
    %913 = vmatmul.mubr.f32.gmra.mrb[0].mxu0 %v795
    %v914 = vpop.f32.mrb[0].mxu0
    %v915 = vadd.f32 %v770, %v914
    %v916 = vpop.f32.mrb[0].mxu0
    %917 = vmatprep.mubr.f32.mxu0 0.0
    %918 = vmatmul.mubr.f32.gmra.mrb[0].mxu0 %v798
    %v919 = vpop.f32.mrb[0].mxu0
    %v920 = vadd.f32 %v771, %v919
    %v921 = vpop.f32.mrb[0].mxu0
    %922 = vmatprep.mubr.f32.mxu0 0.0
    %923 = vmatmul.mubr.f32.gmra.mrb[0].mxu0 %v801
    %v924 = vpop.f32.mrb[0].mxu0
    %v925 = vadd.f32 %v772, %v924
    %v926 = vpop.f32.mrb[0].mxu0
    %927 = vmatprep.mubr.f32.mxu0 0.0
    %928 = vmatmul.mubr.f32.gmra.mrb[0].mxu0 %v804
    %v929 = vpop.f32.mrb[0].mxu0
    %v930 = vadd.f32 %v773, %v929
    %v931 = vpop.f32.mrb[0].mxu0
    %932 = vmatprep.mubr.f32.mxu0 0.0
    %933 = vmatmul.mubr.f32.gmra.mrb[0].mxu0 %v807
    %v934 = vpop.f32.mrb[0].mxu0
    %v935 = vadd.f32 %v774, %v934
    %v936 = vpop.f32.mrb[0].mxu0
    %937 = vmatprep.mubr.f32.mxu0 0.0
    %938 = vmatmul.mubr.f32.gmra.mrb[0].mxu0 %v810
    %v939 = vpop.f32.mrb[0].mxu0
    %v940 = vadd.f32 %v775, %v939
    %v941 = vpop.f32.mrb[0].mxu0
    %942 = vmatprep.mubr.f32.mxu0 0.0
    %943 = vmatmul.mubr.f32.gmra.mrb[0].mxu0 %v813
    %v944 = vpop.f32.mrb[0].mxu0
    %v945 = vadd.f32 %v776, %v944
    %v946 = vpop.f32.mrb[0].mxu0
    %947 = vmatprep.mubr.f32.mxu0 0.0
    %948 = vmatmul.mubr.f32.gmra.mrb[0].mxu0 %v816
    %v949 = vpop.f32.mrb[0].mxu0
    %v950 = vadd.f32 %v777, %v949
    %v951 = vpop.f32.mrb[0].mxu0
    %952 = vmatprep.mubr.f32.mxu0 0.0
    %953 = vmatmul.mubr.f32.gmra.mrb[0].mxu0 %v819
    %v954 = vpop.f32.mrb[0].mxu0
    %v955 = vadd.f32 %v778, %v954
    %v956 = vpop.f32.mrb[0].mxu0
    %957 = vmatprep.mubr.f32.mxu0 0.0
    %958 = vmatmul.mubr.f32.gmra.mrb[0].mxu0 %v822
    %v959 = vpop.f32.mrb[0].mxu0
    %v960 = vadd.f32 %v779, %v959
    %v961 = vpop.f32.mrb[0].mxu0
    %962 = vmatprep.mubr.f32.mxu0 0.0
    %963 = vmatmul.mubr.f32.gmra.mrb[0].mxu0 %v825
    %v964 = vpop.f32.mrb[0].mxu0
    %v965 = vadd.f32 %v780, %v964
    %v966 = vpop.f32.mrb[0].mxu0
    %967 = vmatprep.mubr.f32.mxu0 0.0
    %968 = vmatmul.mubr.f32.gmra.mrb[0].mxu0 %v828
    %v969 = vpop.f32.mrb[0].mxu0
    %v970 = vadd.f32 %v781, %v969
    %v971 = vpop.f32.mrb[0].mxu0
    %972 = vmatprep.mubr.f32.mxu0 0.0
    %973 = vmatmul.mubr.f32.gmra.mrb[0].mxu0 %v831
    %v974 = vpop.f32.mrb[0].mxu0
    %v975 = vadd.f32 %v782, %v974
    %v976 = vpop.f32.mrb[0].mxu0
    %977 = vmatprep.mubr.f32.mxu0 0.0
    %978 = vmatmul.mubr.f32.gmra.mrb[0].mxu0 %v834
    %v979 = vpop.f32.mrb[0].mxu0
    %v980 = vadd.f32 %v783, %v979
    %v981 = vpop.f32.mrb[0].mxu0
    %982 = vmatprep.mubr.f32.mxu0 0.0
    %983 = vmatmul.mubr.f32.gmra.mrb[0].mxu0 %v837
    %v984 = vpop.f32.mrb[0].mxu0
    %v985 = vadd.f32 %v784, %v984
    %v986 = vpop.f32.mrb[0].mxu0
    %987 = vdwg.mxu0
    %vm988 = vcmask 130048
    %v989 = vsel %vm988, %v910, -inf
    %990 = vmax.xlane.f32.xlu0 %v989
    %v991 = vpop.xlane.xlu0 %990
    %v992 = vsel %vm988, %v915, -inf
    %993 = vmax.xlane.f32.xlu0 %v992
    %v994 = vpop.xlane.xlu0 %993
    %v995 = vsel %vm988, %v920, -inf
    %996 = vmax.xlane.f32.xlu0 %v995
    %v997 = vpop.xlane.xlu0 %996
    %v998 = vsel %vm988, %v925, -inf
    %999 = vmax.xlane.f32.xlu0 %v998
    %v1000 = vpop.xlane.xlu0 %999
    %v1001 = vsel %vm988, %v930, -inf
    %1002 = vmax.xlane.f32.xlu0 %v1001
    %v1003 = vpop.xlane.xlu0 %1002
    %v1004 = vsel %vm988, %v935, -inf
    %1005 = vmax.xlane.f32.xlu0 %v1004
    %v1006 = vpop.xlane.xlu0 %1005
    %v1007 = vsel %vm988, %v940, -inf
    %1008 = vmax.xlane.f32.xlu0 %v1007
    %v1009 = vpop.xlane.xlu0 %1008
    %v1010 = vsel %vm988, %v945, -inf
    %1011 = vmax.xlane.f32.xlu0 %v1010
    %v1012 = vpop.xlane.xlu0 %1011
    %v1013 = vsel %vm988, %v950, -inf
    %1014 = vmax.xlane.f32.xlu0 %v1013
    %v1015 = vpop.xlane.xlu0 %1014
    %v1016 = vsel %vm988, %v955, -inf
    %1017 = vmax.xlane.f32.xlu0 %v1016
    %v1018 = vpop.xlane.xlu0 %1017
    %v1019 = vsel %vm988, %v960, -inf
    %1020 = vmax.xlane.f32.xlu0 %v1019
    %v1021 = vpop.xlane.xlu0 %1020
    %v1022 = vsel %vm988, %v965, -inf
    %1023 = vmax.xlane.f32.xlu0 %v1022
    %v1024 = vpop.xlane.xlu0 %1023
    %v1025 = vsel %vm988, %v970, -inf
    %1026 = vmax.xlane.f32.xlu0 %v1025
    %v1027 = vpop.xlane.xlu0 %1026
    %v1028 = vsel %vm988, %v975, -inf
    %1029 = vmax.xlane.f32.xlu0 %v1028
    %v1030 = vpop.xlane.xlu0 %1029
    %v1031 = vsel %vm988, %v980, -inf
    %1032 = vmax.xlane.f32.xlu0 %v1031
    %v1033 = vpop.xlane.xlu0 %1032
    %v1034 = vsel %vm988, %v985, -inf
    %1035 = vmax.xlane.f32.xlu0 %v1034
    %v1036 = vpop.xlane.xlu0 %1035
    %v1037 = vsub.f32 %v910, %v991
    %v1038 = vsub.f32 %v915, %v994
    %v1039 = vsub.f32 %v920, %v997
    %v1040 = vsub.f32 %v925, %v1000
    %v1041 = vsub.f32 %v930, %v1003
    %v1042 = vsub.f32 %v935, %v1006
    %v1043 = vsub.f32 %v940, %v1009
    %v1044 = vsub.f32 %v945, %v1012
    %v1045 = vsub.f32 %v950, %v1015
    %v1046 = vsub.f32 %v955, %v1018
    %v1047 = vsub.f32 %v960, %v1021
    %v1048 = vsub.f32 %v965, %v1024
    %v1049 = vsub.f32 %v970, %v1027
    %v1050 = vsub.f32 %v975, %v1030
    %v1051 = vsub.f32 %v980, %v1033
    %v1052 = vsub.f32 %v985, %v1036
    %v1053 = vmul.f32 %v1037, 1.442695
    %v1054 = vpow.pop %v1053
    %v1055 = vmul.f32 %v1038, 1.442695
    %v1056 = vpow.pop %v1055
    %v1057 = vmul.f32 %v1039, 1.442695
    %v1058 = vpow.pop %v1057
    %v1059 = vmul.f32 %v1040, 1.442695
    %v1060 = vpow.pop %v1059
    %v1061 = vmul.f32 %v1041, 1.442695
    %v1062 = vpow.pop %v1061
    %v1063 = vmul.f32 %v1042, 1.442695
    %v1064 = vpow.pop %v1063
    %v1065 = vmul.f32 %v1043, 1.442695
    %v1066 = vpow.pop %v1065
    %v1067 = vmul.f32 %v1044, 1.442695
    %v1068 = vpow.pop %v1067
    %v1069 = vmul.f32 %v1045, 1.442695
    %v1070 = vpow.pop %v1069
    %v1071 = vmul.f32 %v1046, 1.442695
    %v1072 = vpow.pop %v1071
    %v1073 = vmul.f32 %v1047, 1.442695
    %v1074 = vpow.pop %v1073
    %v1075 = vmul.f32 %v1048, 1.442695
    %v1076 = vpow.pop %v1075
    %v1077 = vmul.f32 %v1049, 1.442695
    %v1078 = vpow.pop %v1077
    %v1079 = vmul.f32 %v1050, 1.442695
    %v1080 = vpow.pop %v1079
    %v1081 = vmul.f32 %v1051, 1.442695
    %v1082 = vpow.pop %v1081
    %v1083 = vmul.f32 %v1052, 1.442695
    %v1084 = vpow.pop %v1083
    %v1085 = vsel %vm988, %v1054, 0.0
    %1086 = vadd.xlane.f32.xlu0 %v1085
    %v1087 = vpop.xlane.xlu0 %1086
    %v1088 = vsel %vm988, %v1056, 0.0
    %1089 = vadd.xlane.f32.xlu0 %v1088
    %v1090 = vpop.xlane.xlu0 %1089
    %v1091 = vsel %vm988, %v1058, 0.0
    %1092 = vadd.xlane.f32.xlu0 %v1091
    %v1093 = vpop.xlane.xlu0 %1092
    %v1094 = vsel %vm988, %v1060, 0.0
    %1095 = vadd.xlane.f32.xlu0 %v1094
    %v1096 = vpop.xlane.xlu0 %1095
    %v1097 = vsel %vm988, %v1062, 0.0
    %1098 = vadd.xlane.f32.xlu0 %v1097
    %v1099 = vpop.xlane.xlu0 %1098
    %v1100 = vsel %vm988, %v1064, 0.0
    %1101 = vadd.xlane.f32.xlu0 %v1100
    %v1102 = vpop.xlane.xlu0 %1101
    %v1103 = vsel %vm988, %v1066, 0.0
    %1104 = vadd.xlane.f32.xlu0 %v1103
    %v1105 = vpop.xlane.xlu0 %1104
    %v1106 = vsel %vm988, %v1068, 0.0
    %1107 = vadd.xlane.f32.xlu0 %v1106
    %v1108 = vpop.xlane.xlu0 %1107
    %v1109 = vsel %vm988, %v1070, 0.0
    %1110 = vadd.xlane.f32.xlu0 %v1109
    %v1111 = vpop.xlane.xlu0 %1110
    %v1112 = vsel %vm988, %v1072, 0.0
    %1113 = vadd.xlane.f32.xlu0 %v1112
    %v1114 = vpop.xlane.xlu0 %1113
    %v1115 = vsel %vm988, %v1074, 0.0
    %1116 = vadd.xlane.f32.xlu0 %v1115
    %v1117 = vpop.xlane.xlu0 %1116
    %v1118 = vsel %vm988, %v1076, 0.0
    %1119 = vadd.xlane.f32.xlu0 %v1118
    %v1120 = vpop.xlane.xlu0 %1119
    %v1121 = vsel %vm988, %v1078, 0.0
    %1122 = vadd.xlane.f32.xlu0 %v1121
    %v1123 = vpop.xlane.xlu0 %1122
    %v1124 = vsel %vm988, %v1080, 0.0
    %1125 = vadd.xlane.f32.xlu0 %v1124
    %v1126 = vpop.xlane.xlu0 %1125
    %v1127 = vsel %vm988, %v1082, 0.0
    %1128 = vadd.xlane.f32.xlu0 %v1127
    %v1129 = vpop.xlane.xlu0 %1128
    %v1130 = vsel %vm988, %v1084, 0.0
    %1131 = vadd.xlane.f32.xlu0 %v1130
    %v1132 = vpop.xlane.xlu0 %1131
    %v1133 = vrcp.pop %v1087
    %v1134 = vrcp.pop %v1090
    %v1135 = vrcp.pop %v1093
    %v1136 = vrcp.pop %v1096
    %v1137 = vrcp.pop %v1099
    %v1138 = vrcp.pop %v1102
    %v1139 = vrcp.pop %v1105
    %v1140 = vrcp.pop %v1108
    %v1141 = vrcp.pop %v1111
    %v1142 = vrcp.pop %v1114
    %v1143 = vrcp.pop %v1117
    %v1144 = vrcp.pop %v1120
    %v1145 = vrcp.pop %v1123
    %v1146 = vrcp.pop %v1126
    %v1147 = vrcp.pop %v1129
    %v1148 = vrcp.pop %v1132
    %v1149 = vmul.f32 %v1054, %v1133
    %v1150 = vmul.f32 %v1056, %v1134
    %v1151 = vmul.f32 %v1058, %v1135
    %v1152 = vmul.f32 %v1060, %v1136
    %v1153 = vmul.f32 %v1062, %v1137
    %v1154 = vmul.f32 %v1064, %v1138
    %v1155 = vmul.f32 %v1066, %v1139
    %v1156 = vmul.f32 %v1068, %v1140
    %v1157 = vmul.f32 %v1070, %v1141
    %v1158 = vmul.f32 %v1072, %v1142
    %v1159 = vmul.f32 %v1074, %v1143
    %v1160 = vmul.f32 %v1076, %v1144
    %v1161 = vmul.f32 %v1078, %v1145
    %v1162 = vmul.f32 %v1080, %v1146
    %v1163 = vmul.f32 %v1082, %v1147
    %v1164 = vmul.f32 %v1084, %v1148
    %1165 = vrot.lane.b32.xlu0 %v637, 64
    %v1166 = vpop.permute.xlu0 %1165
    %1167 = vrot.lane.b32.xlu0 %v642, 64
    %v1168 = vpop.permute.xlu0 %1167
    %v1172 = vsel %vm988, %v1149, 0
    %v1175 = vsel %vm988, %v1150, 0
    %v1178 = vsel %vm988, %v1151, 0
    %v1181 = vsel %vm988, %v1152, 0
    %v1184 = vsel %vm988, %v1153, 0
    %v1187 = vsel %vm988, %v1154, 0
    %v1190 = vsel %vm988, %v1155, 0
    %v1193 = vsel %vm988, %v1156, 0
    %v1196 = vsel %vm988, %v1157, 0
    %v1199 = vsel %vm988, %v1158, 0
    %v1202 = vsel %vm988, %v1159, 0
    %v1205 = vsel %vm988, %v1160, 0
    %v1208 = vsel %vm988, %v1161, 0
    %v1211 = vsel %vm988, %v1162, 0
    %v1214 = vsel %vm988, %v1163, 0
    %v1217 = vsel %vm988, %v1164, 0
    %1219 = vmatprep.subr.mxu0 0.0
    %1220 = vmatpush1.msra.mxu0 %v1166
    %1221 = vmatprep.subr.mxu0 0.0
    %1222 = vmatpush1.msra.mxu0 %v1168
    %1223 = vmatprep.subr.mxu0 0.0
    %1224 = vmatpush1.msra.mxu0 0.0
    %1225 = vmatprep.subr.mxu0 0.0
    %1226 = vmatpush1.msra.mxu0 0.0
    %1227 = vmatprep.subr.mxu0 0.0
    %1228 = vmatpush1.msra.mxu0 0.0
    %1229 = vmatprep.subr.mxu0 0.0
    %1230 = vmatpush1.msra.mxu0 0.0
    %1231 = vmatprep.subr.mxu0 0.0
    %1232 = vmatpush1.msra.mxu0 0.0
    %1233 = vmatprep.subr.mxu0 0.0
    %1234 = vmatpush1.msra.mxu0 0.0
    %1235 = vmatprep.subr.mxu0 0.0
    %1236 = vmatpush1.msra.mxu0 0.0
    %1237 = vmatprep.subr.mxu0 0.0
    %1238 = vmatpush1.msra.mxu0 0.0
    %1239 = vmatprep.subr.mxu0 0.0
    %1240 = vmatpush1.msra.mxu0 0.0
    %1241 = vmatprep.subr.mxu0 0.0
    %1242 = vmatpush1.msra.mxu0 0.0
    %1243 = vmatprep.subr.mxu0 0.0
    %1244 = vmatpush1.msra.mxu0 0.0
    %1245 = vmatprep.subr.mxu0 0.0
    %1246 = vmatpush1.msra.mxu0 0.0
    %1247 = vmatprep.subr.mxu0 0.0
    %1248 = vmatpush1.msra.mxu0 0.0
    %1249 = vmatprep.subr.mxu0 0.0
    %1250 = vmatpush1.msra.mxu0 0.0
    %1251 = vmatprep.subr.mxu0 0.0
    %1252 = vmatpush1.msra.mxu0 0.0
    %1253 = vmatprep.subr.mxu0 0.0
    %1254 = vmatpush1.msra.mxu0 0.0
    %1255 = vmatprep.subr.mxu0 0.0
    %1256 = vmatpush1.msra.mxu0 0.0
    %1257 = vmatprep.subr.mxu0 0.0
    %1258 = vmatpush1.msra.mxu0 0.0
    %1259 = vmatprep.subr.mxu0 0.0
    %1260 = vmatpush1.msra.mxu0 0.0
    %1261 = vmatprep.subr.mxu0 0.0
    %1262 = vmatpush1.msra.mxu0 0.0
    %1263 = vmatprep.subr.mxu0 0.0
    %1264 = vmatpush1.msra.mxu0 0.0
    %1265 = vmatprep.subr.mxu0 0.0
    %1266 = vmatpush1.msra.mxu0 0.0
    %1267 = vmatprep.subr.mxu0 0.0
    %1268 = vmatpush1.msra.mxu0 0.0
    %1269 = vmatprep.subr.mxu0 0.0
    %1270 = vmatpush1.msra.mxu0 0.0
    %1271 = vmatprep.subr.mxu0 0.0
    %1272 = vmatpush1.msra.mxu0 0.0
    %1273 = vmatprep.subr.mxu0 0.0
    %1274 = vmatpush1.msra.mxu0 0.0
    %1275 = vmatprep.subr.mxu0 0.0
    %1276 = vmatpush1.msra.mxu0 0.0
    %1277 = vmatprep.subr.mxu0 0.0
    %1278 = vmatpush1.msra.mxu0 0.0
    %1279 = vmatprep.subr.mxu0 0.0
    %1280 = vmatpush1.msra.mxu0 0.0
    %1281 = vmatprep.subr.mxu0 0.0
    %1282 = vmatpush1.msra.mxu0 0.0
    %1283 = vmatprep.mubr.f32.mxu0 0.0
    %1284 = vmatmul.mubr.f32.gmra.mrb[0].mxu0 %v1172
    %v1285 = vpop.f32.mrb[0].mxu0
    %v1286 = vadd.f32 0.0, %v1285
    %v1287 = vpop.f32.mrb[0].mxu0
    %1288 = vmatprep.mubr.f32.mxu0 0.0
    %1289 = vmatmul.mubr.f32.gmra.mrb[0].mxu0 %v1175
    %v1290 = vpop.f32.mrb[0].mxu0
    %v1291 = vadd.f32 0.0, %v1290
    %v1292 = vpop.f32.mrb[0].mxu0
    %1293 = vmatprep.mubr.f32.mxu0 0.0
    %1294 = vmatmul.mubr.f32.gmra.mrb[0].mxu0 %v1178
    %v1295 = vpop.f32.mrb[0].mxu0
    %v1296 = vadd.f32 0.0, %v1295
    %v1297 = vpop.f32.mrb[0].mxu0
    %1298 = vmatprep.mubr.f32.mxu0 0.0
    %1299 = vmatmul.mubr.f32.gmra.mrb[0].mxu0 %v1181
    %v1300 = vpop.f32.mrb[0].mxu0
    %v1301 = vadd.f32 0.0, %v1300
    %v1302 = vpop.f32.mrb[0].mxu0
    %1303 = vmatprep.mubr.f32.mxu0 0.0
    %1304 = vmatmul.mubr.f32.gmra.mrb[0].mxu0 %v1184
    %v1305 = vpop.f32.mrb[0].mxu0
    %v1306 = vadd.f32 0.0, %v1305
    %v1307 = vpop.f32.mrb[0].mxu0
    %1308 = vmatprep.mubr.f32.mxu0 0.0
    %1309 = vmatmul.mubr.f32.gmra.mrb[0].mxu0 %v1187
    %v1310 = vpop.f32.mrb[0].mxu0
    %v1311 = vadd.f32 0.0, %v1310
    %v1312 = vpop.f32.mrb[0].mxu0
    %1313 = vmatprep.mubr.f32.mxu0 0.0
    %1314 = vmatmul.mubr.f32.gmra.mrb[0].mxu0 %v1190
    %v1315 = vpop.f32.mrb[0].mxu0
    %v1316 = vadd.f32 0.0, %v1315
    %v1317 = vpop.f32.mrb[0].mxu0
    %1318 = vmatprep.mubr.f32.mxu0 0.0
    %1319 = vmatmul.mubr.f32.gmra.mrb[0].mxu0 %v1193
    %v1320 = vpop.f32.mrb[0].mxu0
    %v1321 = vadd.f32 0.0, %v1320
    %v1322 = vpop.f32.mrb[0].mxu0
    %1323 = vmatprep.mubr.f32.mxu0 0.0
    %1324 = vmatmul.mubr.f32.gmra.mrb[0].mxu0 %v1196
    %v1325 = vpop.f32.mrb[0].mxu0
    %v1326 = vadd.f32 0.0, %v1325
    %v1327 = vpop.f32.mrb[0].mxu0
    %1328 = vmatprep.mubr.f32.mxu0 0.0
    %1329 = vmatmul.mubr.f32.gmra.mrb[0].mxu0 %v1199
    %v1330 = vpop.f32.mrb[0].mxu0
    %v1331 = vadd.f32 0.0, %v1330
    %v1332 = vpop.f32.mrb[0].mxu0
    %1333 = vmatprep.mubr.f32.mxu0 0.0
    %1334 = vmatmul.mubr.f32.gmra.mrb[0].mxu0 %v1202
    %v1335 = vpop.f32.mrb[0].mxu0
    %v1336 = vadd.f32 0.0, %v1335
    %v1337 = vpop.f32.mrb[0].mxu0
    %1338 = vmatprep.mubr.f32.mxu0 0.0
    %1339 = vmatmul.mubr.f32.gmra.mrb[0].mxu0 %v1205
    %v1340 = vpop.f32.mrb[0].mxu0
    %v1341 = vadd.f32 0.0, %v1340
    %v1342 = vpop.f32.mrb[0].mxu0
    %1343 = vmatprep.mubr.f32.mxu0 0.0
    %1344 = vmatmul.mubr.f32.gmra.mrb[0].mxu0 %v1208
    %v1345 = vpop.f32.mrb[0].mxu0
    %v1346 = vadd.f32 0.0, %v1345
    %v1347 = vpop.f32.mrb[0].mxu0
    %1348 = vmatprep.mubr.f32.mxu0 0.0
    %1349 = vmatmul.mubr.f32.gmra.mrb[0].mxu0 %v1211
    %v1350 = vpop.f32.mrb[0].mxu0
    %v1351 = vadd.f32 0.0, %v1350
    %v1352 = vpop.f32.mrb[0].mxu0
    %1353 = vmatprep.mubr.f32.mxu0 0.0
    %1354 = vmatmul.mubr.f32.gmra.mrb[0].mxu0 %v1214
    %v1355 = vpop.f32.mrb[0].mxu0
    %v1356 = vadd.f32 0.0, %v1355
    %v1357 = vpop.f32.mrb[0].mxu0
    %1358 = vmatprep.mubr.f32.mxu0 0.0
    %1359 = vmatmul.mubr.f32.gmra.mrb[0].mxu0 %v1217
    %v1360 = vpop.f32.mrb[0].mxu0
    %v1361 = vadd.f32 0.0, %v1360
    %v1362 = vpop.f32.mrb[0].mxu0
    %1363 = vdwg.mxu0
    %1380 = vrot.lane.b32.xlu0 %v753, 32
    %v1381 = vpop.permute.xlu0 %1380
    %1382 = vrot.lane.b32.xlu0 %v754, 32
    %v1383 = vpop.permute.xlu0 %1382
    %1384 = vrot.lane.b32.xlu0 %v755, 32
    %v1385 = vpop.permute.xlu0 %1384
    %1386 = vrot.lane.b32.xlu0 %v756, 32
    %v1387 = vpop.permute.xlu0 %1386
    %1388 = vrot.lane.b32.xlu0 %v757, 32
    %v1389 = vpop.permute.xlu0 %1388
    %1390 = vrot.lane.b32.xlu0 %v758, 32
    %v1391 = vpop.permute.xlu0 %1390
    %1392 = vrot.lane.b32.xlu0 %v759, 32
    %v1393 = vpop.permute.xlu0 %1392
    %1394 = vrot.lane.b32.xlu0 %v760, 32
    %v1395 = vpop.permute.xlu0 %1394
    %1396 = vrot.lane.b32.xlu0 %v761, 32
    %v1397 = vpop.permute.xlu0 %1396
    %1398 = vrot.lane.b32.xlu0 %v762, 32
    %v1399 = vpop.permute.xlu0 %1398
    %1400 = vrot.lane.b32.xlu0 %v763, 32
    %v1401 = vpop.permute.xlu0 %1400
    %1402 = vrot.lane.b32.xlu0 %v764, 32
    %v1403 = vpop.permute.xlu0 %1402
    %1404 = vrot.lane.b32.xlu0 %v765, 32
    %v1405 = vpop.permute.xlu0 %1404
    %1406 = vrot.lane.b32.xlu0 %v766, 32
    %v1407 = vpop.permute.xlu0 %1406
    %1408 = vrot.lane.b32.xlu0 %v767, 32
    %v1409 = vpop.permute.xlu0 %1408
    %1410 = vrot.lane.b32.xlu0 %v768, 32
    %v1411 = vpop.permute.xlu0 %1410
    %v1428 = vmul.f32 %v1286, %v1381
    %v1429 = vmul.f32 %v1291, %v1383
    %v1430 = vmul.f32 %v1296, %v1385
    %v1431 = vmul.f32 %v1301, %v1387
    %v1432 = vmul.f32 %v1306, %v1389
    %v1433 = vmul.f32 %v1311, %v1391
    %v1434 = vmul.f32 %v1316, %v1393
    %v1435 = vmul.f32 %v1321, %v1395
    %v1436 = vmul.f32 %v1326, %v1397
    %v1437 = vmul.f32 %v1331, %v1399
    %v1438 = vmul.f32 %v1336, %v1401
    %v1439 = vmul.f32 %v1341, %v1403
    %v1440 = vmul.f32 %v1346, %v1405
    %v1441 = vmul.f32 %v1351, %v1407
    %v1442 = vmul.f32 %v1356, %v1409
    %v1443 = vmul.f32 %v1361, %v1411
    %v1444 = vld [vmem:[#allocation5 + $0x108] sm:$0xff]
    %v1445 = vld [vmem:[#allocation5 + $0x110] sm:$0xff]
    %v1446 = vld [vmem:[#allocation5 + $0x118] sm:$0xff]
    %v1447 = vld [vmem:[#allocation5 + $0x120] sm:$0xff]
    %v1449 = vsel %vm70, %v1428, 0
    %v1452 = vsel %vm70, %v1429, 0
    %v1455 = vsel %vm70, %v1430, 0
    %v1458 = vsel %vm70, %v1431, 0
    %v1461 = vsel %vm70, %v1432, 0
    %v1464 = vsel %vm70, %v1433, 0
    %v1467 = vsel %vm70, %v1434, 0
    %v1470 = vsel %vm70, %v1435, 0
    %v1473 = vsel %vm70, %v1436, 0
    %v1476 = vsel %vm70, %v1437, 0
    %v1479 = vsel %vm70, %v1438, 0
    %v1482 = vsel %vm70, %v1439, 0
    %v1485 = vsel %vm70, %v1440, 0
    %v1488 = vsel %vm70, %v1441, 0
    %v1491 = vsel %vm70, %v1442, 0
    %v1494 = vsel %vm70, %v1443, 0
    %1496 = vmatprep.subr.mxu0 0.0
    %1497 = vmatpush1.msra.mxu0 %v1444
    %1498 = vmatprep.subr.mxu0 0.0
    %1499 = vmatpush1.msra.mxu0 %v1445
    %1500 = vmatprep.subr.mxu0 0.0
    %1501 = vmatpush1.msra.mxu0 %v1446
    %1502 = vmatprep.subr.mxu0 0.0
    %1503 = vmatpush1.msra.mxu0 %v1447
    %1504 = vmatprep.subr.mxu0 0.0
    %1505 = vmatpush1.msra.mxu0 0.0
    %1506 = vmatprep.subr.mxu0 0.0
    %1507 = vmatpush1.msra.mxu0 0.0
    %1508 = vmatprep.subr.mxu0 0.0
    %1509 = vmatpush1.msra.mxu0 0.0
    %1510 = vmatprep.subr.mxu0 0.0
    %1511 = vmatpush1.msra.mxu0 0.0
    %1512 = vmatprep.subr.mxu0 0.0
    %1513 = vmatpush1.msra.mxu0 0.0
    %1514 = vmatprep.subr.mxu0 0.0
    %1515 = vmatpush1.msra.mxu0 0.0
    %1516 = vmatprep.subr.mxu0 0.0
    %1517 = vmatpush1.msra.mxu0 0.0
    %1518 = vmatprep.subr.mxu0 0.0
    %1519 = vmatpush1.msra.mxu0 0.0
    %1520 = vmatprep.subr.mxu0 0.0
    %1521 = vmatpush1.msra.mxu0 0.0
    %1522 = vmatprep.subr.mxu0 0.0
    %1523 = vmatpush1.msra.mxu0 0.0
    %1524 = vmatprep.subr.mxu0 0.0
    %1525 = vmatpush1.msra.mxu0 0.0
    %1526 = vmatprep.subr.mxu0 0.0
    %1527 = vmatpush1.msra.mxu0 0.0
    %1528 = vmatprep.subr.mxu0 0.0
    %1529 = vmatpush1.msra.mxu0 0.0
    %1530 = vmatprep.subr.mxu0 0.0
    %1531 = vmatpush1.msra.mxu0 0.0
    %1532 = vmatprep.subr.mxu0 0.0
    %1533 = vmatpush1.msra.mxu0 0.0
    %1534 = vmatprep.subr.mxu0 0.0
    %1535 = vmatpush1.msra.mxu0 0.0
    %1536 = vmatprep.subr.mxu0 0.0
    %1537 = vmatpush1.msra.mxu0 0.0
    %1538 = vmatprep.subr.mxu0 0.0
    %1539 = vmatpush1.msra.mxu0 0.0
    %1540 = vmatprep.subr.mxu0 0.0
    %1541 = vmatpush1.msra.mxu0 0.0
    %1542 = vmatprep.subr.mxu0 0.0
    %1543 = vmatpush1.msra.mxu0 0.0
    %1544 = vmatprep.subr.mxu0 0.0
    %1545 = vmatpush1.msra.mxu0 0.0
    %1546 = vmatprep.subr.mxu0 0.0
    %1547 = vmatpush1.msra.mxu0 0.0
    %1548 = vmatprep.subr.mxu0 0.0
    %1549 = vmatpush1.msra.mxu0 0.0
    %1550 = vmatprep.subr.mxu0 0.0
    %1551 = vmatpush1.msra.mxu0 0.0
    %1552 = vmatprep.subr.mxu0 0.0
    %1553 = vmatpush1.msra.mxu0 0.0
    %1554 = vmatprep.subr.mxu0 0.0
    %1555 = vmatpush1.msra.mxu0 0.0
    %1556 = vmatprep.subr.mxu0 0.0
    %1557 = vmatpush1.msra.mxu0 0.0
    %1558 = vmatprep.subr.mxu0 0.0
    %1559 = vmatpush1.msra.mxu0 0.0
    %1560 = vmatprep.mubr.f32.mxu0 0.0
    %1561 = vmatmul.mubr.f32.gmra.mrb[0].mxu0 %v1449
    %v1562 = vpop.f32.mrb[0].mxu0
    %v1563 = vadd.f32 0.0, %v1562
    %v1564 = vpop.f32.mrb[0].mxu0
    %1565 = vmatprep.mubr.f32.mxu0 0.0
    %1566 = vmatmul.mubr.f32.gmra.mrb[0].mxu0 %v1452
    %v1567 = vpop.f32.mrb[0].mxu0
    %v1568 = vadd.f32 0.0, %v1567
    %v1569 = vpop.f32.mrb[0].mxu0
    %1570 = vmatprep.mubr.f32.mxu0 0.0
    %1571 = vmatmul.mubr.f32.gmra.mrb[0].mxu0 %v1455
    %v1572 = vpop.f32.mrb[0].mxu0
    %v1573 = vadd.f32 0.0, %v1572
    %v1574 = vpop.f32.mrb[0].mxu0
    %1575 = vmatprep.mubr.f32.mxu0 0.0
    %1576 = vmatmul.mubr.f32.gmra.mrb[0].mxu0 %v1458
    %v1577 = vpop.f32.mrb[0].mxu0
    %v1578 = vadd.f32 0.0, %v1577
    %v1579 = vpop.f32.mrb[0].mxu0
    %1580 = vmatprep.mubr.f32.mxu0 0.0
    %1581 = vmatmul.mubr.f32.gmra.mrb[0].mxu0 %v1461
    %v1582 = vpop.f32.mrb[0].mxu0
    %v1583 = vadd.f32 0.0, %v1582
    %v1584 = vpop.f32.mrb[0].mxu0
    %1585 = vmatprep.mubr.f32.mxu0 0.0
    %1586 = vmatmul.mubr.f32.gmra.mrb[0].mxu0 %v1464
    %v1587 = vpop.f32.mrb[0].mxu0
    %v1588 = vadd.f32 0.0, %v1587
    %v1589 = vpop.f32.mrb[0].mxu0
    %1590 = vmatprep.mubr.f32.mxu0 0.0
    %1591 = vmatmul.mubr.f32.gmra.mrb[0].mxu0 %v1467
    %v1592 = vpop.f32.mrb[0].mxu0
    %v1593 = vadd.f32 0.0, %v1592
    %v1594 = vpop.f32.mrb[0].mxu0
    %1595 = vmatprep.mubr.f32.mxu0 0.0
    %1596 = vmatmul.mubr.f32.gmra.mrb[0].mxu0 %v1470
    %v1597 = vpop.f32.mrb[0].mxu0
    %v1598 = vadd.f32 0.0, %v1597
    %v1599 = vpop.f32.mrb[0].mxu0
    %1600 = vmatprep.mubr.f32.mxu0 0.0
    %1601 = vmatmul.mubr.f32.gmra.mrb[0].mxu0 %v1473
    %v1602 = vpop.f32.mrb[0].mxu0
    %v1603 = vadd.f32 0.0, %v1602
    %v1604 = vpop.f32.mrb[0].mxu0
    %1605 = vmatprep.mubr.f32.mxu0 0.0
    %1606 = vmatmul.mubr.f32.gmra.mrb[0].mxu0 %v1476
    %v1607 = vpop.f32.mrb[0].mxu0
    %v1608 = vadd.f32 0.0, %v1607
    %v1609 = vpop.f32.mrb[0].mxu0
    %1610 = vmatprep.mubr.f32.mxu0 0.0
    %1611 = vmatmul.mubr.f32.gmra.mrb[0].mxu0 %v1479
    %v1612 = vpop.f32.mrb[0].mxu0
    %v1613 = vadd.f32 0.0, %v1612
    %v1614 = vpop.f32.mrb[0].mxu0
    %1615 = vmatprep.mubr.f32.mxu0 0.0
    %1616 = vmatmul.mubr.f32.gmra.mrb[0].mxu0 %v1482
    %v1617 = vpop.f32.mrb[0].mxu0
    %v1618 = vadd.f32 0.0, %v1617
    %v1619 = vpop.f32.mrb[0].mxu0
    %1620 = vmatprep.mubr.f32.mxu0 0.0
    %1621 = vmatmul.mubr.f32.gmra.mrb[0].mxu0 %v1485
    %v1622 = vpop.f32.mrb[0].mxu0
    %v1623 = vadd.f32 0.0, %v1622
    %v1624 = vpop.f32.mrb[0].mxu0
    %1625 = vmatprep.mubr.f32.mxu0 0.0
    %1626 = vmatmul.mubr.f32.gmra.mrb[0].mxu0 %v1488
    %v1627 = vpop.f32.mrb[0].mxu0
    %v1628 = vadd.f32 0.0, %v1627
    %v1629 = vpop.f32.mrb[0].mxu0
    %1630 = vmatprep.mubr.f32.mxu0 0.0
    %1631 = vmatmul.mubr.f32.gmra.mrb[0].mxu0 %v1491
    %v1632 = vpop.f32.mrb[0].mxu0
    %v1633 = vadd.f32 0.0, %v1632
    %v1634 = vpop.f32.mrb[0].mxu0
    %1635 = vmatprep.mubr.f32.mxu0 0.0
    %1636 = vmatmul.mubr.f32.gmra.mrb[0].mxu0 %v1494
    %v1637 = vpop.f32.mrb[0].mxu0
    %v1638 = vadd.f32 0.0, %v1637
    %v1639 = vpop.f32.mrb[0].mxu0
    %1640 = vdwg.mxu0
    %v1641 = vsel %vm70, %v1563, 0.0
    %v1642 = vsel %vm70, %v1573, 0.0
    %v1643 = vadd.f32 %v1641, %v1642
    %v1644 = vsel %vm70, %v1583, 0.0
    %v1645 = vadd.f32 %v1643, %v1644
    %v1646 = vsel %vm70, %v1593, 0.0
    %v1647 = vadd.f32 %v1645, %v1646
    %v1648 = vsel %vm70, %v1603, 0.0
    %v1649 = vadd.f32 %v1647, %v1648
    %v1650 = vsel %vm70, %v1613, 0.0
    %v1651 = vadd.f32 %v1649, %v1650
    %v1652 = vsel %vm70, %v1623, 0.0
    %v1653 = vadd.f32 %v1651, %v1652
    %v1654 = vsel %vm70, %v1633, 0.0
    %v1655 = vadd.f32 %v1653, %v1654
    %v1656 = vsel %vm70, %v1568, 0.0
    %v1657 = vsel %vm70, %v1578, 0.0
    %v1658 = vadd.f32 %v1656, %v1657
    %v1659 = vsel %vm70, %v1588, 0.0
    %v1660 = vadd.f32 %v1658, %v1659
    %v1661 = vsel %vm70, %v1598, 0.0
    %v1662 = vadd.f32 %v1660, %v1661
    %v1663 = vsel %vm70, %v1608, 0.0
    %v1664 = vadd.f32 %v1662, %v1663
    %v1665 = vsel %vm70, %v1618, 0.0
    %v1666 = vadd.f32 %v1664, %v1665
    %v1667 = vsel %vm70, %v1628, 0.0
    %v1668 = vadd.f32 %v1666, %v1667
    %v1669 = vsel %vm70, %v1638, 0.0
    %v1670 = vadd.f32 %v1668, %v1669
    %v1671 = vld [vmem:[#allocation5 + $0x7] sm:$0x1]
    %v1672 = vlaneseq
    %v1673 = vshrl.u32 %v1672, 7
    %v1674 = vsub.s32 0, %v1673
    %v1675 = vrot.slane %v1671, %v1674
    %v1676 = vadd.f32 %v1655, %v1675
    %v1677 = vadd.f32 %v1670, %v1675
    %v1678 = vadd.f32 %v506, %v1676
    %v1679 = vadd.f32 %v511, %v1677
    %v1680 = vadd.f32 %v1678, %v40
    %v1681 = vadd.f32 %v1679, %v41
    %1682 = vst.msk [vmem:[#allocation7] sm:$0xff] %vm70, %v1680
    %1683 = vst.msk [vmem:[#allocation7 + $0x8] sm:$0xff] %vm70, %v1681
    // Predicated region
    $region18: #{multi_scale_temporal_block.1} parent=1 // pred_check
      _
    $region19: #{multi_scale_temporal_block.1} parent=1 // pred_check_branch
      %1685 = sbr.rel (0) target = $region21
    $region20: #{multi_scale_temporal_block.1} parent=1 // pred_region
      %s1687 = ssub.s32 256, 256
      %1688 = vsyncadd [#allocation4], %s1687
      %s1689 = sshll.u32 [#allocation7], 4
      %s1690 = int_to_ptr.vmem [resolvable:$true] %s1689
      %1695 = dma.vmem_to_hbm [thread:$0]  %s1690, 256, %s2, [#allocation4], 128, 128, 8
    $region21: #{multi_scale_temporal_block.1} parent=1 // pred_fallthru
      _
    // Predicated region
    $region22: #{multi_scale_temporal_block.1} parent=1 // pred_check
      _
    $region23: #{multi_scale_temporal_block.1} parent=1 // pred_check_branch
      %1697 = sbr.rel (0) target = $region25
    $region24: #{multi_scale_temporal_block.1} parent=1 // pred_region
      %1698 = dma.done [#allocation4], 256
    $region25: #{multi_scale_temporal_block.1} parent=1 // pred_fallthru
      _
    %1699 = vsyncpa [#allocation3], 1
    %1700 = vsyncpa [#allocation6], 1
    %1701 = vsyncpa [#allocation4], 1

</llo_original>
